<compile_context>
chip_gen: v7x
topology: tpu7x:2x2x1
jax: 0.10.0
libtpu: 0.0.40
codegen_flags: <defaults>
</compile_context>

<pallas_src>
import jax
import jax.numpy as jnp
from jax import lax
from jax.experimental import pallas as pl
from jax.experimental.pallas import tpu as pltpu

LANE = 128
SUBLANE = 8


def _round_up(x, m):
    return (x + m - 1) // m * m


def _cdiv(a, b):
    return -(-a // b)


def _pad2(w, rows, cols, dtype):
    out = jnp.zeros((rows, cols), dtype)
    return out.at[: w.shape[0], : w.shape[1]].set(w.astype(dtype))


def _vmem_limit_bytes():
    # Explicit scoped-VMEM budget; adaptive so the same plan works on
    # v5e/v6e (128 MiB physical) and v7x (64 MiB physical).
    try:
        cap = int(pltpu.get_tpu_info().vmem_capacity_bytes)
        return max(32 * 1024 * 1024, min(cap // 2, 100 * 1024 * 1024))
    except Exception:
        return 32 * 1024 * 1024


# --------------------------------------------------------------------------
# Kernel A: edge pre-pass.
#   * fused e @ [W_ea | W_m1] matmul (+relu on the MLP1 half, masked rows),
#   * one-hot MXU scatter-add of the edge indicator into per-core partial
#     (src, dst) node accumulators (mean finalized in Kernel B).
# Grid: (NC "parallel" partial-sum slots, tiles-per-slot "arbitrary").
# --------------------------------------------------------------------------
def _make_edge_pre_kernel(tm, tiles_per_core, dnh_p, m_real):
    def kernel(srcr_ref, dstr_ref, e_ref, w_ref, b_ref,
               e1_ref, ssum_ref, dsum_ref):
        f32, bf16 = jnp.float32, jnp.bfloat16
        c = pl.program_id(0)
        i = pl.program_id(1)

        @pl.when(i == 0)
        def _init():
            ssum_ref[...] = jnp.zeros_like(ssum_ref)
            dsum_ref[...] = jnp.zeros_like(dsum_ref)

        # One fused MXU pass: e @ [W_ea | W_m1]  (bf16 in, f32 accumulate).
        y = jnp.dot(e_ref[...], w_ref[...],
                    preferred_element_type=f32) + b_ref[...]
        eind = y[:, :dnh_p]                               # edge indicator (f32)

        # relu(edge_MLP1) with padded edge rows zeroed (bf16 inter-kernel buf).
        base = (c * tiles_per_core + i) * tm
        row_valid = (base + lax.broadcasted_iota(jnp.int32, (tm, 1), 0)) < m_real
        e1_ref[...] = jnp.where(row_valid,
                                jnp.maximum(y[:, dnh_p:], 0.0),
                                0.0).astype(e1_ref.dtype)

        # One-hot MXU scatter-add: (Np, TM) @ (TM, DnH).  Padded edges carry an
        # out-of-range node id so their one-hot columns are all-zero.
        np_rows = ssum_ref.shape[0]
        node_ids = lax.broadcasted_iota(jnp.int32, (np_rows, tm), 0)
        oh_s = jnp.where(node_ids == srcr_ref[...], 1.0, 0.0).astype(bf16)
        oh_d = jnp.where(node_ids == dstr_ref[...], 1.0, 0.0).astype(bf16)
        eind_bf = eind.astype(bf16)
        ssum_ref[...] += jnp.dot(oh_s, eind_bf, preferred_element_type=f32)
        dsum_ref[...] += jnp.dot(oh_d, eind_bf, preferred_element_type=f32)

    return kernel


# --------------------------------------------------------------------------
# Kernel B: node phase (edge-attention gate, GCNConv1/2, node indicator and
# its per-node W_nr projections).  Single block: scene-graph N is small vs
# VMEM.
# TODO(synk): row-tile this kernel (and shard across TensorCores) once the
# Np^2 bf16 adjacency + activations approach the VMEM budget (v7x: 64 MiB).
# --------------------------------------------------------------------------
def _node_kernel(x_ref, a_ref, ssum_ref, dsum_ref, ics_ref, icd_ref,
                 w_gc1_ref, b_gc1_ref, w_gc2_ref, b_gc2_ref,
                 w_na_ref, b_na_ref, w_nrs_ref, w_nro_ref, b_nr_ref,
                 node_out_ref, ps_ref, pd_ref):
    f32, bf16 = jnp.float32, jnp.bfloat16

    # Reduce the per-core partial scatter sums (static, at most 2 slots).
    ssum = ssum_ref[0]
    dsum = dsum_ref[0]
    for k in range(1, ssum_ref.shape[0]):
        ssum = ssum + ssum_ref[k]
        dsum = dsum + dsum_ref[k]

    # agg_edge_indicator = sigmoid(scatter_mean_src * scatter_mean_dst)
    mean_s = ssum * ics_ref[...]
    mean_d = dsum * icd_ref[...]
    agg_edge = jax.nn.sigmoid(mean_s * mean_d)

    a = a_ref[...]                               # bf16 normalized adjacency
    xw = jnp.dot(x_ref[...], w_gc1_ref[...], preferred_element_type=f32)
    h = jnp.maximum(jnp.dot(a, xw.astype(bf16), preferred_element_type=f32)
                    + b_gc1_ref[...], 0.0) * agg_edge
    # F.dropout(training=False) is an identity.
    hw = jnp.dot(h.astype(bf16), w_gc2_ref[...], preferred_element_type=f32)
    node_out = jnp.maximum(jnp.dot(a, hw.astype(bf16),
                                   preferred_element_type=f32)
                           + b_gc2_ref[...], 0.0)
    node_out_ref[...] = node_out

    # Node attention indicator + pre-projected node_indicator_reduction:
    #   P_s = node_ind @ W_nr_s + b_nr,  P_d = node_ind @ W_nr_o
    node_ind = jnp.maximum(jnp.dot(node_out.astype(bf16), w_na_ref[...],
                                   preferred_element_type=f32)
                           + b_na_ref[...], 0.0)
    nib = node_ind.astype(bf16)
    ps_ref[...] = (jnp.dot(nib, w_nrs_ref[...], preferred_element_type=f32)
                   + b_nr_ref[...]).astype(ps_ref.dtype)
    pd_ref[...] = jnp.dot(nib, w_nro_ref[...],
                          preferred_element_type=f32).astype(pd_ref.dtype)


# --------------------------------------------------------------------------
# Kernel C: edge post-pass.  One-hot MXU gather of the pre-projected node
# indicators, sigmoid gate, edge MLP2.  Fully "parallel" over edge tiles.
# --------------------------------------------------------------------------
def _edge_post_kernel(srcc_ref, dstc_ref, e1_ref, ps_ref, pd_ref,
                      w_m2_ref, b_m2_ref, eout_ref):
    f32, bf16 = jnp.float32, jnp.bfloat16
    tm = e1_ref.shape[0]
    np_rows = ps_ref.shape[0]

    node_ids = lax.broadcasted_iota(jnp.int32, (tm, np_rows), 1)
    oh_s = jnp.where(node_ids == srcc_ref[...], 1.0, 0.0).astype(bf16)
    oh_d = jnp.where(node_ids == dstc_ref[...], 1.0, 0.0).astype(bf16)

    # gate = sigmoid(P_s[src] + P_d[dst])  (b_nr already folded into P_s).
    logits = (jnp.dot(oh_s, ps_ref[...], preferred_element_type=f32)
              + jnp.dot(oh_d, pd_ref[...], preferred_element_type=f32))
    gate = jax.nn.sigmoid(logits)

    e1g = e1_ref[...].astype(f32) * gate         # dropout(eval) is identity
    eout_ref[...] = jnp.maximum(
        jnp.dot(e1g.astype(bf16), w_m2_ref[...],
                preferred_element_type=f32) + b_m2_ref[...], 0.0)


# --------------------------------------------------------------------------
# Wrapper
# --------------------------------------------------------------------------
def edge_gcn_forward(node_feats, edge_index, edge_feats, params, tile_m=512):
    """node_feats: (N, Dn) f32, edge_index: (2, M) int32, edge_feats: (M, De) f32."""
    f32, bf16 = jnp.float32, jnp.bfloat16
    N, Dn = node_feats.shape
    M, De = edge_feats.shape
    DnH, DeH = Dn // 2, De // 2

    Dn_p = _round_up(Dn, LANE)
    De_p = _round_up(De, LANE)
    DnH_p = _round_up(DnH, LANE)
    DeH_p = _round_up(DeH, LANE)
    Np = _round_up(N, SUBLANE)

    tile_m = _round_up(tile_m, LANE)
    TM = min(tile_m, _round_up(M, SUBLANE))
    tiles_total = _cdiv(M, TM)
    NC = 2 if tiles_total >= 2 else 1        # partial-sum slots (v7x megacore)
    tpc = _cdiv(tiles_total, NC)             # tiles per slot
    Mp = NC * tpc * TM
    n_tiles = NC * tpc

    src = edge_index[0].astype(jnp.int32)
    dst = edge_index[1].astype(jnp.int32)

    # ---- JAX glue: graph-structure preprocessing (done once per graph) ----
    # GCN-normalized adjacency with self loops (torch_geometric GCNConv),
    # built directly in bf16 to halve HBM->VMEM traffic into the node kernel.
    A = jnp.zeros((N, N), f32).at[dst, src].add(1.0) + jnp.eye(N, dtype=f32)
    deg = A.sum(axis=1)
    dinv = jnp.where(deg > 0, lax.rsqrt(deg), 0.0)
    a_norm = dinv[:, None] * A * dinv[None, :]
    a_pad = jnp.zeros((Np, Np), bf16).at[:N, :N].set(a_norm.astype(bf16))

    # Scatter-mean denominators (per-node edge counts, clamped to >= 1).
    cnt_s = jnp.zeros((N,), f32).at[src].add(1.0)
    cnt_d = jnp.zeros((N,), f32).at[dst].add(1.0)
    inv_cs = jnp.zeros((Np, 1), f32).at[:N, 0].set(1.0 / jnp.maximum(cnt_s, 1.0))
    inv_cd = jnp.zeros((Np, 1), f32).at[:N, 0].set(1.0 / jnp.maximum(cnt_d, 1.0))

    # Lane-dense padded activations and index arrays.  Padded edges carry the
    # out-of-range node id `Np` so their one-hot columns/rows are all-zero.
    x_pad = jnp.zeros((Np, Dn_p), bf16).at[:N, :Dn].set(node_feats.astype(bf16))
    e_pad = jnp.zeros((Mp, De_p), bf16).at[:M, :De].set(edge_feats.astype(bf16))
    src_pad = jnp.full((Mp,), Np, jnp.int32).at[:M].set(src)
    dst_pad = jnp.full((Mp,), Np, jnp.int32).at[:M].set(dst)
    src_row = src_pad.reshape(1, Mp)
    dst_row = dst_pad.reshape(1, Mp)
    src_col = src_pad.reshape(Mp, 1)
    dst_col = dst_pad.reshape(Mp, 1)

    # Padded / fused weights (bf16 for the MXU) and biases (f32).
    w_e1 = jnp.concatenate([_pad2(params['w_ea'], De_p, DnH_p, bf16),
                            _pad2(params['w_m1'], De_p, DeH_p, bf16)], axis=1)
    b_e1 = jnp.concatenate([_pad2(params['b_ea'], 1, DnH_p, f32),
                            _pad2(params['b_m1'], 1, DeH_p, f32)], axis=1)
    w_nrs = _pad2(params['w_nr_s'], DeH_p, DeH_p, bf16)
    w_nro = _pad2(params['w_nr_o'], DeH_p, DeH_p, bf16)
    b_nr = _pad2(params['b_nr'], 1, DeH_p, f32)
    w_gc1 = _pad2(params['w_gc1'], Dn_p, DnH_p, bf16)
    b_gc1 = _pad2(params['b_gc1'], 1, DnH_p, f32)
    w_gc2 = _pad2(params['w_gc2'], DnH_p, Dn_p, bf16)
    b_gc2 = _pad2(params['b_gc2'], 1, Dn_p, f32)
    w_na = _pad2(params['w_na'], Dn_p, DeH_p, bf16)
    b_na = _pad2(params['b_na'], 1, DeH_p, f32)
    w_m2 = _pad2(params['w_m2'], DeH_p, De_p, bf16)
    b_m2 = _pad2(params['b_m2'], 1, De_p, f32)

    vmem_limit = _vmem_limit_bytes()

    # ---- Kernel A: edge pre-pass (fused matmul + one-hot MXU scatter) ------
    e1, ssum_p, dsum_p = pl.pallas_call(
        _make_edge_pre_kernel(TM, tpc, DnH_p, M),
        grid=(NC, tpc),
        in_specs=[
            pl.BlockSpec((1, TM), lambda c, i: (0, c * tpc + i)),             # src
            pl.BlockSpec((1, TM), lambda c, i: (0, c * tpc + i)),             # dst
            pl.BlockSpec((TM, De_p), lambda c, i: (c * tpc + i, 0)),          # e
            pl.BlockSpec((De_p, DnH_p + DeH_p), lambda c, i: (0, 0)),         # W
            pl.BlockSpec((1, DnH_p + DeH_p), lambda c, i: (0, 0)),            # b
        ],
        out_specs=[
            pl.BlockSpec((TM, DeH_p), lambda c, i: (c * tpc + i, 0)),         # e1
            pl.BlockSpec((None, Np, DnH_p), lambda c, i: (c, 0, 0)),          # ssum
            pl.BlockSpec((None, Np, DnH_p), lambda c, i: (c, 0, 0)),          # dsum
        ],
        out_shape=(jax.ShapeDtypeStruct((Mp, DeH_p), bf16),
                   jax.ShapeDtypeStruct((NC, Np, DnH_p), f32),
                   jax.ShapeDtypeStruct((NC, Np, DnH_p), f32)),
        compiler_params=pltpu.CompilerParams(
            dimension_semantics=("parallel", "arbitrary"),
            vmem_limit_bytes=vmem_limit),
    )(src_row, dst_row, e_pad, w_e1, b_e1)

    # ---- Kernel B: node phase ----------------------------------------------
    vspec = pl.BlockSpec(memory_space=pltpu.MemorySpace.VMEM)
    node_out_p, p_s, p_d = pl.pallas_call(
        _node_kernel,
        out_shape=(jax.ShapeDtypeStruct((Np, Dn_p), f32),
                   jax.ShapeDtypeStruct((Np, DeH_p), bf16),
                   jax.ShapeDtypeStruct((Np, DeH_p), bf16)),
        in_specs=[vspec] * 15,
        out_specs=(vspec, vspec, vspec),
        compiler_params=pltpu.CompilerParams(vmem_limit_bytes=vmem_limit),
    )(x_pad, a_pad, ssum_p, dsum_p, inv_cs, inv_cd,
      w_gc1, b_gc1, w_gc2, b_gc2, w_na, b_na, w_nrs, w_nro, b_nr)

    # ---- Kernel C: edge post-pass (one-hot gather + edge MLP2) -------------
    edge_out_p = pl.pallas_call(
        _edge_post_kernel,
        grid=(n_tiles,),
        in_specs=[
            pl.BlockSpec((TM, 1), lambda i: (i, 0)),                          # src
            pl.BlockSpec((TM, 1), lambda i: (i, 0)),                          # dst
            pl.BlockSpec((TM, DeH_p), lambda i: (i, 0)),                      # e1
            pl.BlockSpec((Np, DeH_p), lambda i: (0, 0)),                      # P_s
            pl.BlockSpec((Np, DeH_p), lambda i: (0, 0)),                      # P_d
            pl.BlockSpec((DeH_p, De_p), lambda i: (0, 0)),                    # W_m2
            pl.BlockSpec((1, De_p), lambda i: (0, 0)),                        # b_m2
        ],
        out_specs=pl.BlockSpec((TM, De_p), lambda i: (i, 0)),
        out_shape=jax.ShapeDtypeStruct((Mp, De_p), f32),
        compiler_params=pltpu.CompilerParams(
            dimension_semantics=("parallel",),      # independent edge tiles
            vmem_limit_bytes=vmem_limit),
    )(src_col, dst_col, e1, p_s, p_d, w_m2, b_m2)

    # Un-pad and match torch layout: node (1, N, Dn), edge (1, M, De).
    return {'node_feats': node_out_p[:N, :Dn][None],
            'edge_feats': edge_out_p[:M, :De][None]}


# --------------------------------------------------------------------------
# Pure-JAX f32 reference (eval-mode EdgeGCN forward) for validation.
# --------------------------------------------------------------------------
def edge_gcn_reference(node_feats, edge_index, edge_feats, params):
    N = node_feats.shape[0]
    src, dst = edge_index[0], edge_index[1]
    A = jnp.zeros((N, N), jnp.float32).at[dst, src].add(1.0) + jnp.eye(N)
    deg = A.sum(axis=1)
    dinv = jnp.where(deg > 0, lax.rsqrt(deg), 0.0)
    a_norm = dinv[:, None] * A * dinv[None, :]

    edge_ind = edge_feats @ params['w_ea'] + params['b_ea']
    dh = edge_ind.shape[1]
    sum_s = jnp.zeros((N, dh), jnp.float32).at[src].add(edge_ind)
    sum_d = jnp.zeros((N, dh), jnp.float32).at[dst].add(edge_ind)
    cnt_s = jnp.maximum(jnp.zeros((N,), jnp.float32).at[src].add(1.0), 1.0)[:, None]
    cnt_d = jnp.maximum(jnp.zeros((N,), jnp.float32).at[dst].add(1.0), 1.0)[:, None]
    agg_edge = jax.nn.sigmoid((sum_s / cnt_s) * (sum_d / cnt_d))

    h = jnp.maximum(a_norm @ (node_feats @ params['w_gc1']) + params['b_gc1'],
                    0.0) * agg_edge
    node_out = jnp.maximum(a_norm @ (h @ params['w_gc2']) + params['b_gc2'], 0.0)

    node_ind = jnp.maximum(node_out @ params['w_na'] + params['b_na'], 0.0)
    red = (node_ind[src] @ params['w_nr_s'] + node_ind[dst] @ params['w_nr_o']
           + params['b_nr'])
    gate = jax.nn.sigmoid(red)
    e1 = jnp.maximum(edge_feats @ params['w_m1'] + params['b_m1'], 0.0) * gate
    e2 = jnp.maximum(e1 @ params['w_m2'] + params['b_m2'], 0.0)
    return node_out, e2


if __name__ == "__main__":
    key = jax.random.PRNGKey(0)
    N, M = 20, 300          # nodes, edges
    Dn, De = 32, 32         # num_node_in_embeddings, num_edge_in_embeddings
    ks = jax.random.split(key, 20)

    node_feats = jax.random.normal(ks[0], (N, Dn), jnp.float32)
    edge_feats = jax.random.normal(ks[1], (M, De), jnp.float32)
    src = jax.random.randint(ks[2], (M,), 0, N, dtype=jnp.int32)
    dst = jax.random.randint(ks[3], (M,), 0, N, dtype=jnp.int32)
    edge_index = jnp.stack([src, dst])

    def init(k, shape, scale=0.1):
        return scale * jax.random.normal(k, shape, jnp.float32)

    # Deterministic synthetic parameters (weights stored as (in, out)).
    params = {
        'w_gc1': init(ks[4], (Dn, Dn // 2)),      'b_gc1': init(ks[5], (1, Dn // 2)),
        'w_gc2': init(ks[6], (Dn // 2, Dn)),      'b_gc2': init(ks[7], (1, Dn)),
        'w_ea':  init(ks[8], (De, Dn // 2)),      'b_ea':  init(ks[9], (1, Dn // 2)),
        'w_na':  init(ks[10], (Dn, De // 2)),     'b_na':  init(ks[11], (1, De // 2)),
        'w_nr_s': init(ks[12], (De // 2, De // 2)),
        'w_nr_o': init(ks[13], (De // 2, De // 2)),
        'b_nr':  init(ks[14], (1, De // 2)),
        'w_m1':  init(ks[15], (De, De // 2)),     'b_m1':  init(ks[16], (1, De // 2)),
        'w_m2':  init(ks[17], (De // 2, De)),     'b_m2':  init(ks[18], (1, De)),
    }

    ref_node, ref_edge = edge_gcn_reference(node_feats, edge_index, edge_feats, params)

    # Single-tile path (default tile_m=512 -> one edge tile, NC=1).
    out = edge_gcn_forward(node_feats, edge_index, edge_feats, params)
    jax.block_until_ready(out)
    assert out['node_feats'].shape == (1, N, Dn)
    assert out['edge_feats'].shape == (1, M, De)
    assert bool(jnp.all(jnp.isfinite(out['node_feats'])))
    assert bool(jnp.all(jnp.isfinite(out['edge_feats'])))
    node_err = float(jnp.max(jnp.abs(out['node_feats'][0] - ref_node)))
    edge_err = float(jnp.max(jnp.abs(out['edge_feats'][0] - ref_edge)))
    # bf16 MXU operands -> generous absolute tolerance vs. the f32 reference.
    assert node_err < 0.1 and edge_err < 0.1, (node_err, edge_err)

    # Multi-tile path (tile_m=128 -> 4 edge tiles, 2 partial-sum slots,
    # padded final tile) to exercise the accumulator / masking logic.
    out2 = edge_gcn_forward(node_feats, edge_index, edge_feats, params, tile_m=128)
    jax.block_until_ready(out2)
    node_err2 = float(jnp.max(jnp.abs(out2['node_feats'][0] - ref_node)))
    edge_err2 = float(jnp.max(jnp.abs(out2['edge_feats'][0] - ref_edge)))
    assert node_err2 < 0.1 and edge_err2 < 0.1, (node_err2, edge_err2)

    print("KERNEL_OK")
</pallas_src>

<mosaic_0001>
module attributes {stable_mosaic.version = 11 : i64} {
  func.func @kernel(%arg0: i32, %arg1: i32, %arg2: memref<1x304xi32, #tpu.memory_space<vmem>>, %arg3: memref<1x304xi32, #tpu.memory_space<vmem>>, %arg4: memref<304x128xbf16, #tpu.memory_space<vmem>>, %arg5: memref<128x256xbf16, #tpu.memory_space<vmem>>, %arg6: memref<1x256xf32, #tpu.memory_space<vmem>>, %arg7: memref<304x128xbf16, #tpu.memory_space<vmem>>, %arg8: memref<1x24x128xf32, #tpu.memory_space<vmem>>, %arg9: memref<1x24x128xf32, #tpu.memory_space<vmem>>) attributes {dimension_semantics = [#tpu.dimension_semantics<parallel>, #tpu.dimension_semantics<arbitrary>], iteration_bounds = array<i64: 1, 1>, scalar_prefetch = 0 : i64, scratch_operands = 0 : i64, tpu.core_type = #tpu.core_type<tc>, window_params = [{transform_indices = @transform_0, window_bounds = array<i64: 1, 304>}, {transform_indices = @transform_1, window_bounds = array<i64: 1, 304>}, {transform_indices = @transform_2, window_bounds = array<i64: 304, 128>}, {pipeline_mode = #tpu.pipeline_mode<synchronous>, transform_indices = @transform_3, window_bounds = array<i64: 128, 256>}, {pipeline_mode = #tpu.pipeline_mode<synchronous>, transform_indices = @transform_4, window_bounds = array<i64: 1, 256>}, {transform_indices = @transform_5, window_bounds = array<i64: 304, 128>}, {transform_indices = @transform_6, window_bounds = array<i64: 1, 24, 128>}, {transform_indices = @transform_7, window_bounds = array<i64: 1, 24, 128>}]} {
    %c0_i32 = arith.constant 0 : i32
    %0 = arith.cmpi eq, %arg1, %c0_i32 : i32
    %1 = arith.extui %0 : i1 to i32
    %c0_i32_0 = arith.constant 0 : i32
    %2 = arith.cmpi ne, %1, %c0_i32_0 : i32
    scf.if %2 {
      %cst_32 = arith.constant 0.000000e+00 : f32
      %57 = vector.broadcast %cst_32 : f32 to vector<24x128xf32>
      %c0_33 = arith.constant 0 : index
      %c0_34 = arith.constant 0 : index
      %c0_35 = arith.constant 0 : index
      %58 = vector.load %arg8[%c0_33, %c0_34, %c0_35] : memref<1x24x128xf32, #tpu.memory_space<vmem>>, vector<1x24x128xf32>
      %59 = vector.shape_cast %58 : vector<1x24x128xf32> to vector<24x128xf32>
      %60 = vector.shape_cast %57 : vector<24x128xf32> to vector<1x24x128xf32>
      tpu.vector_store %arg8[%c0_33, %c0_34, %c0_35], %60 {strides = array<i32>} : memref<1x24x128xf32, #tpu.memory_space<vmem>>, vector<1x24x128xf32>,
      %cst_36 = arith.constant 0.000000e+00 : f32
      %61 = vector.broadcast %cst_36 : f32 to vector<24x128xf32>
      %c0_37 = arith.constant 0 : index
      %c0_38 = arith.constant 0 : index
      %c0_39 = arith.constant 0 : index
      %62 = vector.load %arg9[%c0_37, %c0_38, %c0_39] : memref<1x24x128xf32, #tpu.memory_space<vmem>>, vector<1x24x128xf32>
      %63 = vector.shape_cast %62 : vector<1x24x128xf32> to vector<24x128xf32>
      %64 = vector.shape_cast %61 : vector<24x128xf32> to vector<1x24x128xf32>
      tpu.vector_store %arg9[%c0_37, %c0_38, %c0_39], %64 {strides = array<i32>} : memref<1x24x128xf32, #tpu.memory_space<vmem>>, vector<1x24x128xf32>,
    } else {
    }
    %c0 = arith.constant 0 : index
    %c0_1 = arith.constant 0 : index
    %3 = vector.load %arg4[%c0, %c0_1] : memref<304x128xbf16, #tpu.memory_space<vmem>>, vector<304x128xbf16>
    %c0_2 = arith.constant 0 : index
    %c0_3 = arith.constant 0 : index
    %4 = vector.load %arg5[%c0_2, %c0_3] : memref<128x256xbf16, #tpu.memory_space<vmem>>, vector<128x256xbf16>
    %cst = arith.constant dense<0.000000e+00> : vector<304x256xf32>
    %5 = tpu.matmul %3, %4, %cst {dimension_numbers = #tpu.dot_dimension_numbers<[1], [0], [0], [1], [0, 0, 1, 1], [], []>} : vector<304x128xbf16>, vector<128x256xbf16>, vector<304x256xf32> -> vector<304x256xf32>
    %c0_4 = arith.constant 0 : index
    %c0_5 = arith.constant 0 : index
    %6 = vector.load %arg6[%c0_4, %c0_5] : memref<1x256xf32, #tpu.memory_space<vmem>>, vector<1x256xf32>
    %7 = vector.broadcast %6 : vector<1x256xf32> to vector<304x256xf32>
    %8 = arith.addf %5, %7 : vector<304x256xf32>
    %9 = vector.extract_strided_slice %8 {offsets = [0, 0], sizes = [304, 128], strides = [1, 1]} : vector<304x256xf32> to vector<304x128xf32>
    %c1_i32 = arith.constant 1 : i32
    %10 = arith.muli %arg0, %c1_i32 : i32
    %11 = arith.addi %10, %arg1 : i32
    %c304_i32 = arith.constant 304 : i32
    %12 = arith.muli %11, %c304_i32 : i32
    %13 = tpu.iota {dimensions = array<i32: 0>} : vector<304x1xi32>
    %14 = vector.broadcast %12 : i32 to vector<304x1xi32>
    %15 = arith.addi %14, %13 : vector<304x1xi32>
    %c300_i32 = arith.constant 300 : i32
    %16 = vector.broadcast %c300_i32 : i32 to vector<304x1xi32>
    %17 = arith.cmpi slt, %15, %16 : vector<304x1xi32>
    %18 = vector.extract_strided_slice %8 {offsets = [0, 128], sizes = [304, 128], strides = [1, 1]} : vector<304x256xf32> to vector<304x128xf32>
    %cst_6 = arith.constant 0.000000e+00 : f32
    %19 = vector.broadcast %cst_6 : f32 to vector<304x128xf32>
    %20 = arith.maximumf %18, %19 : vector<304x128xf32>
    %cst_7 = arith.constant 0.000000e+00 : f32
    %21 = vector.shape_cast %17 : vector<304x1xi1> to vector<304x1xi1>
    %22 = vector.broadcast %21 : vector<304x1xi1> to vector<304x128xi1>
    %23 = vector.broadcast %cst_7 : f32 to vector<304x128xf32>
    %24 = arith.select %22, %20, %23 : vector<304x128xi1>, vector<304x128xf32>
    %25 = arith.truncf %24 : vector<304x128xf32> to vector<304x128xbf16>
    %c0_8 = arith.constant 0 : index
    %c0_9 = arith.constant 0 : index
    %26 = vector.load %arg7[%c0_8, %c0_9] : memref<304x128xbf16, #tpu.memory_space<vmem>>, vector<304x128xbf16>
    tpu.vector_store %arg7[%c0_8, %c0_9], %25 {strides = array<i32>} : memref<304x128xbf16, #tpu.memory_space<vmem>>, vector<304x128xbf16>,
    %27 = tpu.iota {dimensions = array<i32: 0>} : vector<24x304xi32>
    %c0_10 = arith.constant 0 : index
    %c0_11 = arith.constant 0 : index
    %28 = vector.load %arg2[%c0_10, %c0_11] : memref<1x304xi32, #tpu.memory_space<vmem>>, vector<1x304xi32>
    %29 = vector.broadcast %28 : vector<1x304xi32> to vector<24x304xi32>
    %30 = arith.cmpi eq, %27, %29 : vector<24x304xi32>
    %cst_12 = arith.constant 1.000000e+00 : f32
    %cst_13 = arith.constant 0.000000e+00 : f32
    %31 = vector.broadcast %cst_12 : f32 to vector<24x304xf32>
    %32 = vector.broadcast %cst_13 : f32 to vector<24x304xf32>
    %33 = arith.select %30, %31, %32 : vector<24x304xi1>, vector<24x304xf32>
    %34 = arith.truncf %33 : vector<24x304xf32> to vector<24x304xbf16>
    %c0_14 = arith.constant 0 : index
    %c0_15 = arith.constant 0 : index
    %35 = vector.load %arg3[%c0_14, %c0_15] : memref<1x304xi32, #tpu.memory_space<vmem>>, vector<1x304xi32>
    %36 = vector.broadcast %35 : vector<1x304xi32> to vector<24x304xi32>
    %37 = arith.cmpi eq, %27, %36 : vector<24x304xi32>
    %cst_16 = arith.constant 1.000000e+00 : f32
    %cst_17 = arith.constant 0.000000e+00 : f32
    %38 = vector.broadcast %cst_16 : f32 to vector<24x304xf32>
    %39 = vector.broadcast %cst_17 : f32 to vector<24x304xf32>
    %40 = arith.select %37, %38, %39 : vector<24x304xi1>, vector<24x304xf32>
    %41 = arith.truncf %40 : vector<24x304xf32> to vector<24x304xbf16>
    %42 = arith.truncf %9 : vector<304x128xf32> to vector<304x128xbf16>
    %c0_18 = arith.constant 0 : index
    %c0_19 = arith.constant 0 : index
    %c0_20 = arith.constant 0 : index
    %43 = vector.load %arg8[%c0_18, %c0_19, %c0_20] : memref<1x24x128xf32, #tpu.memory_space<vmem>>, vector<1x24x128xf32>
    %44 = vector.shape_cast %43 : vector<1x24x128xf32> to vector<24x128xf32>
    %cst_21 = arith.constant dense<0.000000e+00> : vector<24x128xf32>
    %45 = tpu.matmul %34, %42, %cst_21 {dimension_numbers = #tpu.dot_dimension_numbers<[1], [0], [0], [1], [0, 0, 1, 1], [], []>} : vector<24x304xbf16>, vector<304x128xbf16>, vector<24x128xf32> -> vector<24x128xf32>
    %46 = arith.addf %44, %45 : vector<24x128xf32>
    %c0_22 = arith.constant 0 : index
    %c0_23 = arith.constant 0 : index
    %c0_24 = arith.constant 0 : index
    %47 = vector.load %arg8[%c0_22, %c0_23, %c0_24] : memref<1x24x128xf32, #tpu.memory_space<vmem>>, vector<1x24x128xf32>
    %48 = vector.shape_cast %47 : vector<1x24x128xf32> to vector<24x128xf32>
    %49 = vector.shape_cast %46 : vector<24x128xf32> to vector<1x24x128xf32>
    tpu.vector_store %arg8[%c0_22, %c0_23, %c0_24], %49 {strides = array<i32>} : memref<1x24x128xf32, #tpu.memory_space<vmem>>, vector<1x24x128xf32>,
    %c0_25 = arith.constant 0 : index
    %c0_26 = arith.constant 0 : index
    %c0_27 = arith.constant 0 : index
    %50 = vector.load %arg9[%c0_25, %c0_26, %c0_27] : memref<1x24x128xf32, #tpu.memory_space<vmem>>, vector<1x24x128xf32>
    %51 = vector.shape_cast %50 : vector<1x24x128xf32> to vector<24x128xf32>
    %cst_28 = arith.constant dense<0.000000e+00> : vector<24x128xf32>
    %52 = tpu.matmul %41, %42, %cst_28 {dimension_numbers = #tpu.dot_dimension_numbers<[1], [0], [0], [1], [0, 0, 1, 1], [], []>} : vector<24x304xbf16>, vector<304x128xbf16>, vector<24x128xf32> -> vector<24x128xf32>
    %53 = arith.addf %51, %52 : vector<24x128xf32>
    %c0_29 = arith.constant 0 : index
    %c0_30 = arith.constant 0 : index
    %c0_31 = arith.constant 0 : index
    %54 = vector.load %arg9[%c0_29, %c0_30, %c0_31] : memref<1x24x128xf32, #tpu.memory_space<vmem>>, vector<1x24x128xf32>
    %55 = vector.shape_cast %54 : vector<1x24x128xf32> to vector<24x128xf32>
    %56 = vector.shape_cast %53 : vector<24x128xf32> to vector<1x24x128xf32>
    tpu.vector_store %arg9[%c0_29, %c0_30, %c0_31], %56 {strides = array<i32>} : memref<1x24x128xf32, #tpu.memory_space<vmem>>, vector<1x24x128xf32>,
    return
  }
  func.func @transform_0(%arg0: i32, %arg1: i32) -> (i32, i32) {
    %c1_i32 = arith.constant 1 : i32
    %0 = arith.muli %arg0, %c1_i32 : i32
    %1 = arith.addi %0, %arg1 : i32
    %c0_i32 = arith.constant 0 : i32
    %c0_i32_0 = arith.constant 0 : i32
    return %c0_i32, %1 : i32, i32
  }
  func.func @transform_1(%arg0: i32, %arg1: i32) -> (i32, i32) {
    %c1_i32 = arith.constant 1 : i32
    %0 = arith.muli %arg0, %c1_i32 : i32
    %1 = arith.addi %0, %arg1 : i32
    %c0_i32 = arith.constant 0 : i32
    %c0_i32_0 = arith.constant 0 : i32
    return %c0_i32, %1 : i32, i32
  }
  func.func @transform_2(%arg0: i32, %arg1: i32) -> (i32, i32) {
    %c1_i32 = arith.constant 1 : i32
    %0 = arith.muli %arg0, %c1_i32 : i32
    %1 = arith.addi %0, %arg1 : i32
    %c0_i32 = arith.constant 0 : i32
    %c0_i32_0 = arith.constant 0 : i32
    return %1, %c0_i32 : i32, i32
  }
  func.func @transform_3(%arg0: i32, %arg1: i32) -> (i32, i32) {
    %c0_i32 = arith.constant 0 : i32
    %c0_i32_0 = arith.constant 0 : i32
    %c0_i32_1 = arith.constant 0 : i32
    return %c0_i32, %c0_i32_0 : i32, i32
  }
  func.func @transform_4(%arg0: i32, %arg1: i32) -> (i32, i32) {
    %c0_i32 = arith.constant 0 : i32
    %c0_i32_0 = arith.constant 0 : i32
    %c0_i32_1 = arith.constant 0 : i32
    return %c0_i32, %c0_i32_0 : i32, i32
  }
  func.func @transform_5(%arg0: i32, %arg1: i32) -> (i32, i32) {
    %c1_i32 = arith.constant 1 : i32
    %0 = arith.muli %arg0, %c1_i32 : i32
    %1 = arith.addi %0, %arg1 : i32
    %c0_i32 = arith.constant 0 : i32
    %c0_i32_0 = arith.constant 0 : i32
    return %1, %c0_i32 : i32, i32
  }
  func.func @transform_6(%arg0: i32, %arg1: i32) -> (i32, i32, i32) {
    %c0_i32 = arith.constant 0 : i32
    %c0_i32_0 = arith.constant 0 : i32
    %c0_i32_1 = arith.constant 0 : i32
    return %arg0, %c0_i32, %c0_i32_0 : i32, i32, i32
  }
  func.func @transform_7(%arg0: i32, %arg1: i32) -> (i32, i32, i32) {
    %c0_i32 = arith.constant 0 : i32
    %c0_i32_0 = arith.constant 0 : i32
    %c0_i32_1 = arith.constant 0 : i32
    return %arg0, %c0_i32, %c0_i32_0 : i32, i32, i32
  }
}

</mosaic_0001>

<llo_original>
// kernel: tpu_custom_call.1
$region0: #{tpu_custom_call.1}
  #allocation0 [shape = 'u32[]', space=smem, size = 0x4, offset = 0x4, fixed_abs, tag = 'smem constant byte address 0x4 - core index']
  #allocation1 [shape = 'u32[144,128]{1,0:T(1,128)}', space=vmem, size = 0x12000, scoped, tag = 'internal scratch']
  %s0 = inlined_call_operand.hbm [shape: s32[1,304], index: 0, kind: input, shape index: {}]
  %s1 = inlined_call_operand.vmem [shape: s32[1,304], index: 1, kind: input, shape index: {}]
  %s2 = inlined_call_operand.hbm [shape: bf16[304,128], index: 2, kind: input, shape index: {}]
  %s3 = inlined_call_operand.hbm [shape: bf16[128,256], index: 3, kind: input, shape index: {}]
  %s4 = inlined_call_operand.vmem [shape: f32[1,256], index: 4, kind: input, shape index: {}]
  %s5 = inlined_call_operand.hbm [shape: bf16[304,128], index: 5, kind: output, shape index: {0}]
  %s6 = inlined_call_operand.hbm [shape: f32[1,24,128], index: 6, kind: output, shape index: {1}]
  %s7 = inlined_call_operand.hbm [shape: f32[1,24,128], index: 7, kind: output, shape index: {2}]
  %8 = xla_tuple %s5, %s6, %s7
  %s9 = sld [smem:[#allocation0]]
  $region62: #{tpu_custom_call.1} parent=0
    _
  %s11 = ssub.s32 1, %s9
  %s12 = scalar_select 0, %s11, %s9
  $region1: #{tpu_custom_call.1} parent=0
    #allocation2 [shape = 'u8[1536]{0}', space=vmem, size = 0x800, scoped, tag = 'input window, operand 0, single buffered']
    #allocation3 [shape = 's32[1]{0}', space=sflag, size = 0x4, scoped, tag = 'scoped memory for tpu_custom_call.1']
    #allocation4 [shape = 's32[1]{0}', space=sflag, size = 0x4, scoped, tag = 'scoped memory for tpu_custom_call.1']
    #allocation5 [shape = 'u8[77824]{0}', space=vmem, size = 0x13000, scoped, tag = 'input window, operand 2, single buffered']
    #allocation6 [shape = 's32[1]{0}', space=sflag, size = 0x4, scoped, tag = 'scoped memory for tpu_custom_call.1']
    #allocation7 [shape = 'u8[65536]{0}', space=vmem, size = 0x10000, scoped, tag = 'input window, operand 3, single buffered']
    #allocation8 [shape = 'u8[77824]{0}', space=vmem, size = 0x13000, scoped, tag = 'output window, operand 0, single buffered']
    #allocation9 [shape = 'u8[12288]{0}', space=vmem, size = 0x3000, scoped, tag = 'output window, operand 1, single buffered']
    #allocation10 [shape = 's32[1]{0}', space=sflag, size = 0x4, scoped, tag = 'scoped memory for tpu_custom_call.1']
    #allocation11 [shape = 'u8[12288]{0}', space=vmem, size = 0x3000, scoped, tag = 'output window, operand 2, single buffered']
    %13 = vsyncpa [#allocation3], 0
    %14 = vsyncpa [#allocation6], 0
    %15 = vsyncpa [#allocation4], 0
    %16 = vsyncpa [#allocation10], 0
    // Predicated region
    $region2: #{tpu_custom_call.1} parent=1 // pred_check
      _
    $region3: #{tpu_custom_call.1} parent=1 // pred_check_branch
      %18 = sbr.rel (0) target = $region5
    $region4: #{tpu_custom_call.1} parent=1 // pred_region
      %s19 = sadd.s32 0, 0
      %s20 = smul.u32 3, %s19
      %s22 = ssub.s32 48, 48
      %23 = vsyncadd [#allocation3], %s22
      %s24 = smul.addr %s20, 16
      %s25 = scalar_lea.hbm %s0, %s24
      %s27 = sshll.u32 [#allocation2], 4
      %s28 = int_to_ptr.vmem [resolvable:$true] %s27
      %30 = dma.hbm_to_vmem [thread:$0]  %s25, 48, %s28, [#allocation3]
    $region5: #{tpu_custom_call.1} parent=1 // pred_fallthru
      _
    // Predicated region
    $region6: #{tpu_custom_call.1} parent=1 // pred_check
      _
    $region7: #{tpu_custom_call.1} parent=1 // pred_check_branch
      %32 = sbr.rel (0) target = $region9
    $region8: #{tpu_custom_call.1} parent=1 // pred_region
      %s33 = sadd.s32 0, 0
      %s34 = smul.u32 3, %s33
      %p35 = scmp.lt.s32.totalorder %s34, 2
      %s36 = scalar_select %p35, %s34, 2
      %s37 = scalar_lea.vmem %s1, %s36
      %s38 = sadd.s32 0, 0
      %s39 = smul.u32 3, %s38
    $region9: #{tpu_custom_call.1} parent=1 // pred_fallthru
      _
    // Predicated region
    $region10: #{tpu_custom_call.1} parent=1 // pred_check
      _
    $region11: #{tpu_custom_call.1} parent=1 // pred_check_branch
      %41 = sbr.rel (0) target = $region13
    $region12: #{tpu_custom_call.1} parent=1 // pred_region
      %s42 = sadd.s32 0, 0
      %s43 = smul.u32 38, %s42
      %s45 = ssub.s32 2432, 2432
      %46 = vsyncadd [#allocation6], %s45
      %s47 = smul.addr %s43, 64
      %s48 = scalar_lea.hbm %s2, %s47
      %s49 = sshll.u32 [#allocation5], 4
      %s50 = int_to_ptr.vmem [resolvable:$true] %s49
      %55 = dma.hbm_to_vmem [thread:$0]  %s48, 2432, %s50, [#allocation6], 64, 64, 4
    $region13: #{tpu_custom_call.1} parent=1 // pred_fallthru
      _
    // Predicated region
    $region14: #{tpu_custom_call.1} parent=1 // pred_check
      _
    $region15: #{tpu_custom_call.1} parent=1 // pred_check_branch
      %57 = sbr.rel (0) target = $region17
    $region16: #{tpu_custom_call.1} parent=1 // pred_region
      %s59 = ssub.s32 2048, 2048
      %60 = vsyncadd [#allocation6], %s59
      %s61 = sshll.u32 [#allocation7], 4
      %s62 = int_to_ptr.vmem [resolvable:$true] %s61
      %67 = dma.hbm_to_vmem [thread:$0]  %s3, 2048, %s62, [#allocation6], 128, 128, 8
    $region17: #{tpu_custom_call.1} parent=1 // pred_fallthru
      _
    // Predicated region
    $region18: #{tpu_custom_call.1} parent=1 // pred_check
      _
    $region19: #{tpu_custom_call.1} parent=1 // pred_check_branch
      %69 = sbr.rel (0) target = $region21
    $region20: #{tpu_custom_call.1} parent=1 // pred_region
      _
    $region21: #{tpu_custom_call.1} parent=1 // pred_fallthru
      _
    // Predicated region
    $region22: #{tpu_custom_call.1} parent=1 // pred_check
      _
    $region23: #{tpu_custom_call.1} parent=1 // pred_check_branch
      %71 = sbr.rel (0) target = $region25
    $region24: #{tpu_custom_call.1} parent=1 // pred_region
      %72 = dma.done [#allocation3], 48
    $region25: #{tpu_custom_call.1} parent=1 // pred_fallthru
      _
    // Predicated region
    $region26: #{tpu_custom_call.1} parent=1 // pred_check
      _
    $region27: #{tpu_custom_call.1} parent=1 // pred_check_branch
      %74 = sbr.rel (0) target = $region29
    $region28: #{tpu_custom_call.1} parent=1 // pred_region
      %75 = dma.done [#allocation6], 2432
    $region29: #{tpu_custom_call.1} parent=1 // pred_fallthru
      _
    // Predicated region
    $region30: #{tpu_custom_call.1} parent=1 // pred_check
      _
    $region31: #{tpu_custom_call.1} parent=1 // pred_check_branch
      %77 = sbr.rel (0) target = $region33
    $region32: #{tpu_custom_call.1} parent=1 // pred_region
      %78 = dma.done [#allocation6], 2048
    $region33: #{tpu_custom_call.1} parent=1 // pred_fallthru
      _
    %s79 = sadd.s32 0, 0
    %s80 = smul.u32 3, %s79
    %p81 = scmp.lt.s32.totalorder %s80, 2
    %s82 = scalar_select %p81, %s80, 2
    %s83 = scalar_lea.vmem %s1, %s82
    %s84 = sadd.s32 0, 0
    %s85 = smul.u32 3, %s84
    %s86 = sadd.s32 0, 0
    %s87 = smul.u32 3, %s86
    %p88 = scmp.lt.s32.totalorder %s87, 2
    %s89 = scalar_select %p88, %s87, 2
    %s90 = scalar_lea.vmem %s1, %s89
    %s91 = sadd.s32 0, 0
    %s92 = smul.u32 3, %s91
    %s93 = sadd.s32 0, 0
    %s94 = smul.u32 38, %s93
    %s95 = sadd.s32 0, 0
    %s96 = smul.u32 38, %s95
    %p98 = scmp.eq.s32.totalorder 0, 0
    // Predicated region
    $region34: #{tpu_custom_call.1} parent=1 // pred_check
      %p99 = pneg %p98
    $region35: #{tpu_custom_call.1} parent=1 // pred_check_branch
      %101 = sbr.rel (%p99) target = $region37
    $region36: #{tpu_custom_call.1} parent=1 // pred_region
      %102 = vst [vmem:[#allocation9] sm:$0xff] 0.0
      %103 = vst [vmem:[#allocation9 + $0x8] sm:$0xff] 0.0
      %104 = vst [vmem:[#allocation9 + $0x10] sm:$0xff] 0.0
      %105 = vst [vmem:[#allocation11] sm:$0xff] 0.0
      %106 = vst [vmem:[#allocation11 + $0x8] sm:$0xff] 0.0
      %107 = vst [vmem:[#allocation11 + $0x10] sm:$0xff] 0.0
    $region37: #{tpu_custom_call.1} parent=1 // pred_fallthru
      _
    %v108 = vld [vmem:[#allocation5] sm:$0xf]
    %v109 = vld [vmem:[#allocation5 + $0x4] sm:$0xf]
    %v110 = vld [vmem:[#allocation5 + $0x8] sm:$0xf]
    %v111 = vld [vmem:[#allocation5 + $0xc] sm:$0xf]
    %v112 = vld [vmem:[#allocation5 + $0x10] sm:$0xf]
    %v113 = vld [vmem:[#allocation5 + $0x14] sm:$0xf]
    %v114 = vld [vmem:[#allocation5 + $0x18] sm:$0xf]
    %v115 = vld [vmem:[#allocation5 + $0x1c] sm:$0xf]
    %v116 = vld [vmem:[#allocation5 + $0x20] sm:$0xf]
    %v117 = vld [vmem:[#allocation5 + $0x24] sm:$0xf]
    %v118 = vld [vmem:[#allocation5 + $0x28] sm:$0xf]
    %v119 = vld [vmem:[#allocation5 + $0x2c] sm:$0xf]
    %v120 = vld [vmem:[#allocation5 + $0x30] sm:$0xf]
    %v121 = vld [vmem:[#allocation5 + $0x34] sm:$0xf]
    %v122 = vld [vmem:[#allocation5 + $0x38] sm:$0xf]
    %v123 = vld [vmem:[#allocation5 + $0x3c] sm:$0xf]
    %v124 = vld [vmem:[#allocation5 + $0x40] sm:$0xf]
    %v125 = vld [vmem:[#allocation5 + $0x44] sm:$0xf]
    %v126 = vld [vmem:[#allocation5 + $0x48] sm:$0xf]
    %v127 = vld [vmem:[#allocation5 + $0x4c] sm:$0xf]
    %v128 = vld [vmem:[#allocation5 + $0x50] sm:$0xf]
    %v129 = vld [vmem:[#allocation5 + $0x54] sm:$0xf]
    %v130 = vld [vmem:[#allocation5 + $0x58] sm:$0xf]
    %v131 = vld [vmem:[#allocation5 + $0x5c] sm:$0xf]
    %v132 = vld [vmem:[#allocation5 + $0x60] sm:$0xf]
    %v133 = vld [vmem:[#allocation5 + $0x64] sm:$0xf]
    %v134 = vld [vmem:[#allocation5 + $0x68] sm:$0xf]
    %v135 = vld [vmem:[#allocation5 + $0x6c] sm:$0xf]
    %v136 = vld [vmem:[#allocation5 + $0x70] sm:$0xf]
    %v137 = vld [vmem:[#allocation5 + $0x74] sm:$0xf]
    %v138 = vld [vmem:[#allocation5 + $0x78] sm:$0xf]
    %v139 = vld [vmem:[#allocation5 + $0x7c] sm:$0xf]
    %v140 = vld [vmem:[#allocation5 + $0x80] sm:$0xf]
    %v141 = vld [vmem:[#allocation5 + $0x84] sm:$0xf]
    %v142 = vld [vmem:[#allocation5 + $0x88] sm:$0xf]
    %v143 = vld [vmem:[#allocation5 + $0x8c] sm:$0xf]
    %v144 = vld [vmem:[#allocation5 + $0x90] sm:$0xf]
    %v145 = vld [vmem:[#allocation5 + $0x94] sm:$0xf]
    %v146 = vld [vmem:[#allocation7] sm:$0xff]
    %v147 = vld [vmem:[#allocation7 + $0x8] sm:$0xff]
    %v148 = vld [vmem:[#allocation7 + $0x10] sm:$0xff]
    %v149 = vld [vmem:[#allocation7 + $0x18] sm:$0xff]
    %v150 = vld [vmem:[#allocation7 + $0x20] sm:$0xff]
    %v151 = vld [vmem:[#allocation7 + $0x28] sm:$0xff]
    %v152 = vld [vmem:[#allocation7 + $0x30] sm:$0xff]
    %v153 = vld [vmem:[#allocation7 + $0x38] sm:$0xff]
    %v154 = vld [vmem:[#allocation7 + $0x40] sm:$0xff]
    %v155 = vld [vmem:[#allocation7 + $0x48] sm:$0xff]
    %v156 = vld [vmem:[#allocation7 + $0x50] sm:$0xff]
    %v157 = vld [vmem:[#allocation7 + $0x58] sm:$0xff]
    %v158 = vld [vmem:[#allocation7 + $0x60] sm:$0xff]
    %v159 = vld [vmem:[#allocation7 + $0x68] sm:$0xff]
    %v160 = vld [vmem:[#allocation7 + $0x70] sm:$0xff]
    %v161 = vld [vmem:[#allocation7 + $0x78] sm:$0xff]
    %v162 = vld [vmem:[%s4] sm:$0x3]
    %v164 = vlaneseq
    %v165 = vshrl.u32 %v164, 7
    %v166 = vsub.s32 0, %v165
    %v167 = vrot.slane %v162, %v166
    %v168 = vlaneseq
    %v169 = vshrl.u32 %v168, 7
    %v170 = vsub.s32 1, %v169
    %v171 = vrot.slane %v162, %v170
    %v212 = vunpack.c.l.b16 %v108
    %v213 = vunpack.c.l.b16 %v109
    %v214 = vunpack.c.l.b16 %v110
    %v215 = vunpack.c.l.b16 %v111
    %v216 = vunpack.c.l.b16 %v112
    %v217 = vunpack.c.l.b16 %v113
    %v218 = vunpack.c.l.b16 %v114
    %v219 = vunpack.c.l.b16 %v115
    %v220 = vunpack.c.l.b16 %v116
    %v221 = vunpack.c.l.b16 %v117
    %v222 = vunpack.c.l.b16 %v118
    %v223 = vunpack.c.l.b16 %v119
    %v224 = vunpack.c.l.b16 %v120
    %v225 = vunpack.c.l.b16 %v121
    %v226 = vunpack.c.l.b16 %v122
    %v227 = vunpack.c.l.b16 %v123
    %v228 = vunpack.c.l.b16 %v124
    %v229 = vunpack.c.l.b16 %v125
    %v230 = vunpack.c.l.b16 %v126
    %v231 = vunpack.c.l.b16 %v127
    %v232 = vunpack.c.l.b16 %v128
    %v233 = vunpack.c.l.b16 %v129
    %v234 = vunpack.c.l.b16 %v130
    %v235 = vunpack.c.l.b16 %v131
    %v236 = vunpack.c.l.b16 %v132
    %v237 = vunpack.c.l.b16 %v133
    %v238 = vunpack.c.l.b16 %v134
    %v239 = vunpack.c.l.b16 %v135
    %v240 = vunpack.c.l.b16 %v136
    %v241 = vunpack.c.l.b16 %v137
    %v242 = vunpack.c.l.b16 %v138
    %v243 = vunpack.c.l.b16 %v139
    %v244 = vunpack.c.l.b16 %v140
    %v245 = vunpack.c.l.b16 %v141
    %v246 = vunpack.c.l.b16 %v142
    %v247 = vunpack.c.l.b16 %v143
    %v248 = vunpack.c.l.b16 %v144
    %v249 = vunpack.c.l.b16 %v145
    %v250 = vpack.c.b16 %v213, %v212
    %v251 = vpack.c.b16 %v215, %v214
    %v252 = vpack.c.b16 %v217, %v216
    %v253 = vpack.c.b16 %v219, %v218
    %v254 = vpack.c.b16 %v221, %v220
    %v255 = vpack.c.b16 %v223, %v222
    %v256 = vpack.c.b16 %v225, %v224
    %v257 = vpack.c.b16 %v227, %v226
    %v258 = vpack.c.b16 %v229, %v228
    %v259 = vpack.c.b16 %v231, %v230
    %v260 = vpack.c.b16 %v233, %v232
    %v261 = vpack.c.b16 %v235, %v234
    %v262 = vpack.c.b16 %v237, %v236
    %v263 = vpack.c.b16 %v239, %v238
    %v264 = vpack.c.b16 %v241, %v240
    %v265 = vpack.c.b16 %v243, %v242
    %v266 = vpack.c.b16 %v245, %v244
    %v267 = vpack.c.b16 %v247, %v246
    %v268 = vpack.c.b16 %v249, %v248
    %v304 = vunpack.c.l.b16 %v146
    %v305 = vunpack.c.h.b16 %v146
    %v306 = vunpack.c.l.b16 %v147
    %v307 = vunpack.c.h.b16 %v147
    %v308 = vunpack.c.l.b16 %v148
    %v309 = vunpack.c.h.b16 %v148
    %v310 = vunpack.c.l.b16 %v149
    %v311 = vunpack.c.h.b16 %v149
    %v312 = vunpack.c.l.b16 %v150
    %v313 = vunpack.c.h.b16 %v150
    %v314 = vunpack.c.l.b16 %v151
    %v315 = vunpack.c.h.b16 %v151
    %v316 = vunpack.c.l.b16 %v152
    %v317 = vunpack.c.h.b16 %v152
    %v318 = vunpack.c.l.b16 %v153
    %v319 = vunpack.c.h.b16 %v153
    %v320 = vunpack.c.l.b16 %v154
    %v321 = vunpack.c.h.b16 %v154
    %v322 = vunpack.c.l.b16 %v155
    %v323 = vunpack.c.h.b16 %v155
    %v324 = vunpack.c.l.b16 %v156
    %v325 = vunpack.c.h.b16 %v156
    %v326 = vunpack.c.l.b16 %v157
    %v327 = vunpack.c.h.b16 %v157
    %v328 = vunpack.c.l.b16 %v158
    %v329 = vunpack.c.h.b16 %v158
    %v330 = vunpack.c.l.b16 %v159
    %v331 = vunpack.c.h.b16 %v159
    %v332 = vunpack.c.l.b16 %v160
    %v333 = vunpack.c.h.b16 %v160
    %v334 = vunpack.c.l.b16 %v161
    %v335 = vunpack.c.h.b16 %v161
    %v336 = vpack.c.b16 %v306, %v304
    %v337 = vpack.c.b16 %v307, %v305
    %v338 = vpack.c.b16 %v310, %v308
    %v339 = vpack.c.b16 %v311, %v309
    %v340 = vpack.c.b16 %v314, %v312
    %v341 = vpack.c.b16 %v315, %v313
    %v342 = vpack.c.b16 %v318, %v316
    %v343 = vpack.c.b16 %v319, %v317
    %v344 = vpack.c.b16 %v322, %v320
    %v345 = vpack.c.b16 %v323, %v321
    %v346 = vpack.c.b16 %v326, %v324
    %v347 = vpack.c.b16 %v327, %v325
    %v348 = vpack.c.b16 %v330, %v328
    %v349 = vpack.c.b16 %v331, %v329
    %v350 = vpack.c.b16 %v334, %v332
    %v351 = vpack.c.b16 %v335, %v333
    %368 = vmatprep.subr.bf16.mxu0 %v337
    %369 = vmatpush1.bf16.msra.mxu0 %v336
    %370 = vmatprep.subr.bf16.mxu0 %v339
    %371 = vmatpush1.bf16.msra.mxu0 %v338
    %372 = vmatprep.subr.bf16.mxu0 %v341
    %373 = vmatpush1.bf16.msra.mxu0 %v340
    %374 = vmatprep.subr.bf16.mxu0 %v343
    %375 = vmatpush1.bf16.msra.mxu0 %v342
    %376 = vmatprep.subr.bf16.mxu0 %v345
    %377 = vmatpush1.bf16.msra.mxu0 %v344
    %378 = vmatprep.subr.bf16.mxu0 %v347
    %379 = vmatpush1.bf16.msra.mxu0 %v346
    %380 = vmatprep.subr.bf16.mxu0 %v349
    %381 = vmatpush1.bf16.msra.mxu0 %v348
    %382 = vmatprep.subr.bf16.mxu0 %v351
    %383 = vmatpush1.bf16.msra.mxu0 %v350
    %384 = vmatprep.subr.bf16.mxu0 0
    %385 = vmatpush1.bf16.msra.mxu0 0
    %386 = vmatprep.subr.bf16.mxu0 0
    %387 = vmatpush1.bf16.msra.mxu0 0
    %388 = vmatprep.subr.bf16.mxu0 0
    %389 = vmatpush1.bf16.msra.mxu0 0
    %390 = vmatprep.subr.bf16.mxu0 0
    %391 = vmatpush1.bf16.msra.mxu0 0
    %392 = vmatprep.subr.bf16.mxu0 0
    %393 = vmatpush1.bf16.msra.mxu0 0
    %394 = vmatprep.subr.bf16.mxu0 0
    %395 = vmatpush1.bf16.msra.mxu0 0
    %396 = vmatprep.subr.bf16.mxu0 0
    %397 = vmatpush1.bf16.msra.mxu0 0
    %398 = vmatprep.subr.bf16.mxu0 0
    %399 = vmatpush1.bf16.msra.mxu0 0
    %400 = vmatprep.mubr.bf16.mxu0 0
    %401 = vmatmul.mubr.bf16.gmra.mrb[0].mxu0 %v250
    %v402 = vpop.f32.mrb[0].mxu0
    %v403 = vadd.f32 %v167, %v402
    %v404 = vpop.f32.mrb[0].mxu0
    %v405 = vadd.f32 %v171, %v404
    %v406 = vpop.f32.mrb[0].mxu0
    %v407 = vadd.f32 %v167, %v406
    %v408 = vpop.f32.mrb[0].mxu0
    %v409 = vadd.f32 %v171, %v408
    %410 = vmatprep.mubr.bf16.mxu0 0
    %411 = vmatmul.mubr.bf16.gmra.mrb[0].mxu0 %v251
    %v412 = vpop.f32.mrb[0].mxu0
    %v413 = vadd.f32 %v167, %v412
    %v414 = vpop.f32.mrb[0].mxu0
    %v415 = vadd.f32 %v171, %v414
    %v416 = vpop.f32.mrb[0].mxu0
    %v417 = vadd.f32 %v167, %v416
    %v418 = vpop.f32.mrb[0].mxu0
    %v419 = vadd.f32 %v171, %v418
    %420 = vmatprep.mubr.bf16.mxu0 0
    %421 = vmatmul.mubr.bf16.gmra.mrb[0].mxu0 %v252
    %v422 = vpop.f32.mrb[0].mxu0
    %v423 = vadd.f32 %v167, %v422
    %v424 = vpop.f32.mrb[0].mxu0
    %v425 = vadd.f32 %v171, %v424
    %v426 = vpop.f32.mrb[0].mxu0
    %v427 = vadd.f32 %v167, %v426
    %v428 = vpop.f32.mrb[0].mxu0
    %v429 = vadd.f32 %v171, %v428
    %430 = vmatprep.mubr.bf16.mxu0 0
    %431 = vmatmul.mubr.bf16.gmra.mrb[0].mxu0 %v253
    %v432 = vpop.f32.mrb[0].mxu0
    %v433 = vadd.f32 %v167, %v432
    %v434 = vpop.f32.mrb[0].mxu0
    %v435 = vadd.f32 %v171, %v434
    %v436 = vpop.f32.mrb[0].mxu0
    %v437 = vadd.f32 %v167, %v436
    %v438 = vpop.f32.mrb[0].mxu0
    %v439 = vadd.f32 %v171, %v438
    %440 = vmatprep.mubr.bf16.mxu0 0
    %441 = vmatmul.mubr.bf16.gmra.mrb[0].mxu0 %v254
    %v442 = vpop.f32.mrb[0].mxu0
    %v443 = vadd.f32 %v167, %v442
    %v444 = vpop.f32.mrb[0].mxu0
    %v445 = vadd.f32 %v171, %v444
    %v446 = vpop.f32.mrb[0].mxu0
    %v447 = vadd.f32 %v167, %v446
    %v448 = vpop.f32.mrb[0].mxu0
    %v449 = vadd.f32 %v171, %v448
    %450 = vmatprep.mubr.bf16.mxu0 0
    %451 = vmatmul.mubr.bf16.gmra.mrb[0].mxu0 %v255
    %v452 = vpop.f32.mrb[0].mxu0
    %v453 = vadd.f32 %v167, %v452
    %v454 = vpop.f32.mrb[0].mxu0
    %v455 = vadd.f32 %v171, %v454
    %v456 = vpop.f32.mrb[0].mxu0
    %v457 = vadd.f32 %v167, %v456
    %v458 = vpop.f32.mrb[0].mxu0
    %v459 = vadd.f32 %v171, %v458
    %460 = vmatprep.mubr.bf16.mxu0 0
    %461 = vmatmul.mubr.bf16.gmra.mrb[0].mxu0 %v256
    %v462 = vpop.f32.mrb[0].mxu0
    %v463 = vadd.f32 %v167, %v462
    %v464 = vpop.f32.mrb[0].mxu0
    %v465 = vadd.f32 %v171, %v464
    %v466 = vpop.f32.mrb[0].mxu0
    %v467 = vadd.f32 %v167, %v466
    %v468 = vpop.f32.mrb[0].mxu0
    %v469 = vadd.f32 %v171, %v468
    %470 = vmatprep.mubr.bf16.mxu0 0
    %471 = vmatmul.mubr.bf16.gmra.mrb[0].mxu0 %v257
    %v472 = vpop.f32.mrb[0].mxu0
    %v473 = vadd.f32 %v167, %v472
    %v474 = vpop.f32.mrb[0].mxu0
    %v475 = vadd.f32 %v171, %v474
    %v476 = vpop.f32.mrb[0].mxu0
    %v477 = vadd.f32 %v167, %v476
    %v478 = vpop.f32.mrb[0].mxu0
    %v479 = vadd.f32 %v171, %v478
    %480 = vmatprep.mubr.bf16.mxu0 0
    %481 = vmatmul.mubr.bf16.gmra.mrb[0].mxu0 %v258
    %v482 = vpop.f32.mrb[0].mxu0
    %v483 = vadd.f32 %v167, %v482
    %v484 = vpop.f32.mrb[0].mxu0
    %v485 = vadd.f32 %v171, %v484
    %v486 = vpop.f32.mrb[0].mxu0
    %v487 = vadd.f32 %v167, %v486
    %v488 = vpop.f32.mrb[0].mxu0
    %v489 = vadd.f32 %v171, %v488
    %490 = vmatprep.mubr.bf16.mxu0 0
    %491 = vmatmul.mubr.bf16.gmra.mrb[0].mxu0 %v259
    %v492 = vpop.f32.mrb[0].mxu0
    %v493 = vadd.f32 %v167, %v492
    %v494 = vpop.f32.mrb[0].mxu0
    %v495 = vadd.f32 %v171, %v494
    %v496 = vpop.f32.mrb[0].mxu0
    %v497 = vadd.f32 %v167, %v496
    %v498 = vpop.f32.mrb[0].mxu0
    %v499 = vadd.f32 %v171, %v498
    %500 = vmatprep.mubr.bf16.mxu0 0
    %501 = vmatmul.mubr.bf16.gmra.mrb[0].mxu0 %v260
    %v502 = vpop.f32.mrb[0].mxu0
    %v503 = vadd.f32 %v167, %v502
    %v504 = vpop.f32.mrb[0].mxu0
    %v505 = vadd.f32 %v171, %v504
    %v506 = vpop.f32.mrb[0].mxu0
    %v507 = vadd.f32 %v167, %v506
    %v508 = vpop.f32.mrb[0].mxu0
    %v509 = vadd.f32 %v171, %v508
    %510 = vmatprep.mubr.bf16.mxu0 0
    %511 = vmatmul.mubr.bf16.gmra.mrb[0].mxu0 %v261
    %v512 = vpop.f32.mrb[0].mxu0
    %v513 = vadd.f32 %v167, %v512
    %v514 = vpop.f32.mrb[0].mxu0
    %v515 = vadd.f32 %v171, %v514
    %v516 = vpop.f32.mrb[0].mxu0
    %v517 = vadd.f32 %v167, %v516
    %v518 = vpop.f32.mrb[0].mxu0
    %v519 = vadd.f32 %v171, %v518
    %520 = vmatprep.mubr.bf16.mxu0 0
    %521 = vmatmul.mubr.bf16.gmra.mrb[0].mxu0 %v262
    %v522 = vpop.f32.mrb[0].mxu0
    %v523 = vadd.f32 %v167, %v522
    %v524 = vpop.f32.mrb[0].mxu0
    %v525 = vadd.f32 %v171, %v524
    %v526 = vpop.f32.mrb[0].mxu0
    %v527 = vadd.f32 %v167, %v526
    %v528 = vpop.f32.mrb[0].mxu0
    %v529 = vadd.f32 %v171, %v528
    %530 = vmatprep.mubr.bf16.mxu0 0
    %531 = vmatmul.mubr.bf16.gmra.mrb[0].mxu0 %v263
    %v532 = vpop.f32.mrb[0].mxu0
    %v533 = vadd.f32 %v167, %v532
    %v534 = vpop.f32.mrb[0].mxu0
    %v535 = vadd.f32 %v171, %v534
    %v536 = vpop.f32.mrb[0].mxu0
    %v537 = vadd.f32 %v167, %v536
    %v538 = vpop.f32.mrb[0].mxu0
    %v539 = vadd.f32 %v171, %v538
    %540 = vmatprep.mubr.bf16.mxu0 0
    %541 = vmatmul.mubr.bf16.gmra.mrb[0].mxu0 %v264
    %v542 = vpop.f32.mrb[0].mxu0
    %v543 = vadd.f32 %v167, %v542
    %v544 = vpop.f32.mrb[0].mxu0
    %v545 = vadd.f32 %v171, %v544
    %v546 = vpop.f32.mrb[0].mxu0
    %v547 = vadd.f32 %v167, %v546
    %v548 = vpop.f32.mrb[0].mxu0
    %v549 = vadd.f32 %v171, %v548
    %550 = vmatprep.mubr.bf16.mxu0 0
    %551 = vmatmul.mubr.bf16.gmra.mrb[0].mxu0 %v265
    %v552 = vpop.f32.mrb[0].mxu0
    %v553 = vadd.f32 %v167, %v552
    %v554 = vpop.f32.mrb[0].mxu0
    %v555 = vadd.f32 %v171, %v554
    %v556 = vpop.f32.mrb[0].mxu0
    %v557 = vadd.f32 %v167, %v556
    %v558 = vpop.f32.mrb[0].mxu0
    %v559 = vadd.f32 %v171, %v558
    %560 = vmatprep.mubr.bf16.mxu0 0
    %561 = vmatmul.mubr.bf16.gmra.mrb[0].mxu0 %v266
    %v562 = vpop.f32.mrb[0].mxu0
    %v563 = vadd.f32 %v167, %v562
    %v564 = vpop.f32.mrb[0].mxu0
    %v565 = vadd.f32 %v171, %v564
    %v566 = vpop.f32.mrb[0].mxu0
    %v567 = vadd.f32 %v167, %v566
    %v568 = vpop.f32.mrb[0].mxu0
    %v569 = vadd.f32 %v171, %v568
    %570 = vmatprep.mubr.bf16.mxu0 0
    %571 = vmatmul.mubr.bf16.gmra.mrb[0].mxu0 %v267
    %v572 = vpop.f32.mrb[0].mxu0
    %v573 = vadd.f32 %v167, %v572
    %v574 = vpop.f32.mrb[0].mxu0
    %v575 = vadd.f32 %v171, %v574
    %v576 = vpop.f32.mrb[0].mxu0
    %v577 = vadd.f32 %v167, %v576
    %v578 = vpop.f32.mrb[0].mxu0
    %v579 = vadd.f32 %v171, %v578
    %580 = vmatprep.mubr.bf16.mxu0 0
    %581 = vmatmul.mubr.bf16.gmra.mrb[0].mxu0 %v268
    %v582 = vpop.f32.mrb[0].mxu0
    %v583 = vadd.f32 %v167, %v582
    %v584 = vpop.f32.mrb[0].mxu0
    %v585 = vadd.f32 %v171, %v584
    %v586 = vpop.f32.mrb[0].mxu0
    %v587 = vadd.f32 %v167, %v586
    %v588 = vpop.f32.mrb[0].mxu0
    %v589 = vadd.f32 %v171, %v588
    %590 = vdwg.mxu0
    %s591 = sadd.s32 0, 0
    %s592 = smul.u32 %s591, 304
    %v593 = vlaneseq
    %v594 = vshrl.u32 %v593, 7
    %v595 = vadd.s32 %v594, 8
    %v596 = vadd.s32 %v594, 16
    %v597 = vadd.s32 %v594, 24
    %v598 = vadd.s32 %v594, 32
    %v599 = vadd.s32 %v594, 40
    %v600 = vadd.s32 %v594, 48
    %v601 = vadd.s32 %v594, 56
    %v602 = vadd.s32 %v594, 64
    %v603 = vadd.s32 %v594, 72
    %v604 = vadd.s32 %v594, 80
    %v605 = vadd.s32 %v594, 88
    %v606 = vadd.s32 %v594, 96
    %v607 = vadd.s32 %v594, 104
    %v608 = vadd.s32 %v594, 112
    %v609 = vadd.s32 %v594, 120
    %v610 = vadd.s32 %v594, 128
    %v611 = vadd.s32 %v594, 136
    %v612 = vadd.s32 %v594, 144
    %v613 = vadd.s32 %v594, 152
    %v614 = vadd.s32 %v594, 160
    %v615 = vadd.s32 %v594, 168
    %v616 = vadd.s32 %v594, 176
    %v617 = vadd.s32 %v594, 184
    %v618 = vadd.s32 %v594, 192
    %v619 = vadd.s32 %v594, 200
    %v620 = vadd.s32 %v594, 208
    %v621 = vadd.s32 %v594, 216
    %v622 = vadd.s32 %v594, 224
    %v623 = vadd.s32 %v594, 232
    %v624 = vadd.s32 %v594, 240
    %v625 = vadd.s32 %v594, 248
    %v626 = vadd.s32 %v594, 256
    %v627 = vadd.s32 %v594, 264
    %v628 = vadd.s32 %v594, 272
    %v629 = vadd.s32 %v594, 280
    %v630 = vadd.s32 %v594, 288
    %v631 = vadd.s32 %v594, 296
    %v632 = vstv %s592
    %v633 = vadd.s32 %v632, %v594
    %v634 = vadd.s32 %v632, %v595
    %v635 = vadd.s32 %v632, %v596
    %v636 = vadd.s32 %v632, %v597
    %v637 = vadd.s32 %v632, %v598
    %v638 = vadd.s32 %v632, %v599
    %v639 = vadd.s32 %v632, %v600
    %v640 = vadd.s32 %v632, %v601
    %v641 = vadd.s32 %v632, %v602
    %v642 = vadd.s32 %v632, %v603
    %v643 = vadd.s32 %v632, %v604
    %v644 = vadd.s32 %v632, %v605
    %v645 = vadd.s32 %v632, %v606
    %v646 = vadd.s32 %v632, %v607
    %v647 = vadd.s32 %v632, %v608
    %v648 = vadd.s32 %v632, %v609
    %v649 = vadd.s32 %v632, %v610
    %v650 = vadd.s32 %v632, %v611
    %v651 = vadd.s32 %v632, %v612
    %v652 = vadd.s32 %v632, %v613
    %v653 = vadd.s32 %v632, %v614
    %v654 = vadd.s32 %v632, %v615
    %v655 = vadd.s32 %v632, %v616
    %v656 = vadd.s32 %v632, %v617
    %v657 = vadd.s32 %v632, %v618
    %v658 = vadd.s32 %v632, %v619
    %v659 = vadd.s32 %v632, %v620
    %v660 = vadd.s32 %v632, %v621
    %v661 = vadd.s32 %v632, %v622
    %v662 = vadd.s32 %v632, %v623
    %v663 = vadd.s32 %v632, %v624
    %v664 = vadd.s32 %v632, %v625
    %v665 = vadd.s32 %v632, %v626
    %v666 = vadd.s32 %v632, %v627
    %v667 = vadd.s32 %v632, %v628
    %v668 = vadd.s32 %v632, %v629
    %v669 = vadd.s32 %v632, %v630
    %v670 = vadd.s32 %v632, %v631
    %vm671 = vcmp.lt.s32.totalorder %v633, 300
    %vm672 = vcmp.lt.s32.totalorder %v634, 300
    %vm673 = vcmp.lt.s32.totalorder %v635, 300
    %vm674 = vcmp.lt.s32.totalorder %v636, 300
    %vm675 = vcmp.lt.s32.totalorder %v637, 300
    %vm676 = vcmp.lt.s32.totalorder %v638, 300
    %vm677 = vcmp.lt.s32.totalorder %v639, 300
    %vm678 = vcmp.lt.s32.totalorder %v640, 300
    %vm679 = vcmp.lt.s32.totalorder %v641, 300
    %vm680 = vcmp.lt.s32.totalorder %v642, 300
    %vm681 = vcmp.lt.s32.totalorder %v643, 300
    %vm682 = vcmp.lt.s32.totalorder %v644, 300
    %vm683 = vcmp.lt.s32.totalorder %v645, 300
    %vm684 = vcmp.lt.s32.totalorder %v646, 300
    %vm685 = vcmp.lt.s32.totalorder %v647, 300
    %vm686 = vcmp.lt.s32.totalorder %v648, 300
    %vm687 = vcmp.lt.s32.totalorder %v649, 300
    %vm688 = vcmp.lt.s32.totalorder %v650, 300
    %vm689 = vcmp.lt.s32.totalorder %v651, 300
    %vm690 = vcmp.lt.s32.totalorder %v652, 300
    %vm691 = vcmp.lt.s32.totalorder %v653, 300
    %vm692 = vcmp.lt.s32.totalorder %v654, 300
    %vm693 = vcmp.lt.s32.totalorder %v655, 300
    %vm694 = vcmp.lt.s32.totalorder %v656, 300
    %vm695 = vcmp.lt.s32.totalorder %v657, 300
    %vm696 = vcmp.lt.s32.totalorder %v658, 300
    %vm697 = vcmp.lt.s32.totalorder %v659, 300
    %vm698 = vcmp.lt.s32.totalorder %v660, 300
    %vm699 = vcmp.lt.s32.totalorder %v661, 300
    %vm700 = vcmp.lt.s32.totalorder %v662, 300
    %vm701 = vcmp.lt.s32.totalorder %v663, 300
    %vm702 = vcmp.lt.s32.totalorder %v664, 300
    %vm703 = vcmp.lt.s32.totalorder %v665, 300
    %vm704 = vcmp.lt.s32.totalorder %v666, 300
    %vm705 = vcmp.lt.s32.totalorder %v667, 300
    %vm706 = vcmp.lt.s32.totalorder %v668, 300
    %vm707 = vcmp.lt.s32.totalorder %v669, 300
    %vm708 = vcmp.lt.s32.totalorder %v670, 300
    %v709 = vmax.f32 %v405, 0.0
    %v710 = vmax.f32 %v409, 0.0
    %v711 = vmax.f32 %v415, 0.0
    %v712 = vmax.f32 %v419, 0.0
    %v713 = vmax.f32 %v425, 0.0
    %v714 = vmax.f32 %v429, 0.0
    %v715 = vmax.f32 %v435, 0.0
    %v716 = vmax.f32 %v439, 0.0
    %v717 = vmax.f32 %v445, 0.0
    %v718 = vmax.f32 %v449, 0.0
    %v719 = vmax.f32 %v455, 0.0
    %v720 = vmax.f32 %v459, 0.0
    %v721 = vmax.f32 %v465, 0.0
    %v722 = vmax.f32 %v469, 0.0
    %v723 = vmax.f32 %v475, 0.0
    %v724 = vmax.f32 %v479, 0.0
    %v725 = vmax.f32 %v485, 0.0
    %v726 = vmax.f32 %v489, 0.0
    %v727 = vmax.f32 %v495, 0.0
    %v728 = vmax.f32 %v499, 0.0
    %v729 = vmax.f32 %v505, 0.0
    %v730 = vmax.f32 %v509, 0.0
    %v731 = vmax.f32 %v515, 0.0
    %v732 = vmax.f32 %v519, 0.0
    %v733 = vmax.f32 %v525, 0.0
    %v734 = vmax.f32 %v529, 0.0
    %v735 = vmax.f32 %v535, 0.0
    %v736 = vmax.f32 %v539, 0.0
    %v737 = vmax.f32 %v545, 0.0
    %v738 = vmax.f32 %v549, 0.0
    %v739 = vmax.f32 %v555, 0.0
    %v740 = vmax.f32 %v559, 0.0
    %v741 = vmax.f32 %v565, 0.0
    %v742 = vmax.f32 %v569, 0.0
    %v743 = vmax.f32 %v575, 0.0
    %v744 = vmax.f32 %v579, 0.0
    %v745 = vmax.f32 %v585, 0.0
    %v746 = vmax.f32 %v589, 0.0
    %v747 = vsel %vm671, 1, 0
    %v748 = vsel %vm672, 1, 0
    %v749 = vsel %vm673, 1, 0
    %v750 = vsel %vm674, 1, 0
    %v751 = vsel %vm675, 1, 0
    %v752 = vsel %vm676, 1, 0
    %v753 = vsel %vm677, 1, 0
    %v754 = vsel %vm678, 1, 0
    %v755 = vsel %vm679, 1, 0
    %v756 = vsel %vm680, 1, 0
    %v757 = vsel %vm681, 1, 0
    %v758 = vsel %vm682, 1, 0
    %v759 = vsel %vm683, 1, 0
    %v760 = vsel %vm684, 1, 0
    %v761 = vsel %vm685, 1, 0
    %v762 = vsel %vm686, 1, 0
    %v763 = vsel %vm687, 1, 0
    %v764 = vsel %vm688, 1, 0
    %v765 = vsel %vm689, 1, 0
    %v766 = vsel %vm690, 1, 0
    %v767 = vsel %vm691, 1, 0
    %v768 = vsel %vm692, 1, 0
    %v769 = vsel %vm693, 1, 0
    %v770 = vsel %vm694, 1, 0
    %v771 = vsel %vm695, 1, 0
    %v772 = vsel %vm696, 1, 0
    %v773 = vsel %vm697, 1, 0
    %v774 = vsel %vm698, 1, 0
    %v775 = vsel %vm699, 1, 0
    %v776 = vsel %vm700, 1, 0
    %v777 = vsel %vm701, 1, 0
    %v778 = vsel %vm702, 1, 0
    %v779 = vsel %vm703, 1, 0
    %v780 = vsel %vm704, 1, 0
    %v781 = vsel %vm705, 1, 0
    %v782 = vsel %vm706, 1, 0
    %v783 = vsel %vm707, 1, 0
    %v784 = vsel %vm708, 1, 0
    %vm785 = vcmp.eq.s32.totalorder %v747, 1
    %vm786 = vcmp.eq.s32.totalorder %v748, 1
    %vm787 = vcmp.eq.s32.totalorder %v749, 1
    %vm788 = vcmp.eq.s32.totalorder %v750, 1
    %vm789 = vcmp.eq.s32.totalorder %v751, 1
    %vm790 = vcmp.eq.s32.totalorder %v752, 1
    %vm791 = vcmp.eq.s32.totalorder %v753, 1
    %vm792 = vcmp.eq.s32.totalorder %v754, 1
    %vm793 = vcmp.eq.s32.totalorder %v755, 1
    %vm794 = vcmp.eq.s32.totalorder %v756, 1
    %vm795 = vcmp.eq.s32.totalorder %v757, 1
    %vm796 = vcmp.eq.s32.totalorder %v758, 1
    %vm797 = vcmp.eq.s32.totalorder %v759, 1
    %vm798 = vcmp.eq.s32.totalorder %v760, 1
    %vm799 = vcmp.eq.s32.totalorder %v761, 1
    %vm800 = vcmp.eq.s32.totalorder %v762, 1
    %vm801 = vcmp.eq.s32.totalorder %v763, 1
    %vm802 = vcmp.eq.s32.totalorder %v764, 1
    %vm803 = vcmp.eq.s32.totalorder %v765, 1
    %vm804 = vcmp.eq.s32.totalorder %v766, 1
    %vm805 = vcmp.eq.s32.totalorder %v767, 1
    %vm806 = vcmp.eq.s32.totalorder %v768, 1
    %vm807 = vcmp.eq.s32.totalorder %v769, 1
    %vm808 = vcmp.eq.s32.totalorder %v770, 1
    %vm809 = vcmp.eq.s32.totalorder %v771, 1
    %vm810 = vcmp.eq.s32.totalorder %v772, 1
    %vm811 = vcmp.eq.s32.totalorder %v773, 1
    %vm812 = vcmp.eq.s32.totalorder %v774, 1
    %vm813 = vcmp.eq.s32.totalorder %v775, 1
    %vm814 = vcmp.eq.s32.totalorder %v776, 1
    %vm815 = vcmp.eq.s32.totalorder %v777, 1
    %vm816 = vcmp.eq.s32.totalorder %v778, 1
    %vm817 = vcmp.eq.s32.totalorder %v779, 1
    %vm818 = vcmp.eq.s32.totalorder %v780, 1
    %vm819 = vcmp.eq.s32.totalorder %v781, 1
    %vm820 = vcmp.eq.s32.totalorder %v782, 1
    %vm821 = vcmp.eq.s32.totalorder %v783, 1
    %vm822 = vcmp.eq.s32.totalorder %v784, 1
    %v823 = vsel %vm785, %v709, 0.0
    %v824 = vsel %vm786, %v710, 0.0
    %v825 = vsel %vm787, %v711, 0.0
    %v826 = vsel %vm788, %v712, 0.0
    %v827 = vsel %vm789, %v713, 0.0
    %v828 = vsel %vm790, %v714, 0.0
    %v829 = vsel %vm791, %v715, 0.0
    %v830 = vsel %vm792, %v716, 0.0
    %v831 = vsel %vm793, %v717, 0.0
    %v832 = vsel %vm794, %v718, 0.0
    %v833 = vsel %vm795, %v719, 0.0
    %v834 = vsel %vm796, %v720, 0.0
    %v835 = vsel %vm797, %v721, 0.0
    %v836 = vsel %vm798, %v722, 0.0
    %v837 = vsel %vm799, %v723, 0.0
    %v838 = vsel %vm800, %v724, 0.0
    %v839 = vsel %vm801, %v725, 0.0
    %v840 = vsel %vm802, %v726, 0.0
    %v841 = vsel %vm803, %v727, 0.0
    %v842 = vsel %vm804, %v728, 0.0
    %v843 = vsel %vm805, %v729, 0.0
    %v844 = vsel %vm806, %v730, 0.0
    %v845 = vsel %vm807, %v731, 0.0
    %v846 = vsel %vm808, %v732, 0.0
    %v847 = vsel %vm809, %v733, 0.0
    %v848 = vsel %vm810, %v734, 0.0
    %v849 = vsel %vm811, %v735, 0.0
    %v850 = vsel %vm812, %v736, 0.0
    %v851 = vsel %vm813, %v737, 0.0
    %v852 = vsel %vm814, %v738, 0.0
    %v853 = vsel %vm815, %v739, 0.0
    %v854 = vsel %vm816, %v740, 0.0
    %v855 = vsel %vm817, %v741, 0.0
    %v856 = vsel %vm818, %v742, 0.0
    %v857 = vsel %vm819, %v743, 0.0
    %v858 = vsel %vm820, %v744, 0.0
    %v859 = vsel %vm821, %v745, 0.0
    %v860 = vsel %vm822, %v746, 0.0
    %v861 = vpack.c.bf16 %v824, %v823
    %v862 = vpack.c.bf16 %v826, %v825
    %v863 = vpack.c.bf16 %v828, %v827
    %v864 = vpack.c.bf16 %v830, %v829
    %v865 = vpack.c.bf16 %v832, %v831
    %v866 = vpack.c.bf16 %v834, %v833
    %v867 = vpack.c.bf16 %v836, %v835
    %v868 = vpack.c.bf16 %v838, %v837
    %v869 = vpack.c.bf16 %v840, %v839
    %v870 = vpack.c.bf16 %v842, %v841
    %v871 = vpack.c.bf16 %v844, %v843
    %v872 = vpack.c.bf16 %v846, %v845
    %v873 = vpack.c.bf16 %v848, %v847
    %v874 = vpack.c.bf16 %v850, %v849
    %v875 = vpack.c.bf16 %v852, %v851
    %v876 = vpack.c.bf16 %v854, %v853
    %v877 = vpack.c.bf16 %v856, %v855
    %v878 = vpack.c.bf16 %v858, %v857
    %v879 = vpack.c.bf16 %v860, %v859
    %v899 = vunpack.c.l.b16 %v861
    %v900 = vunpack.c.h.b16 %v861
    %v901 = vunpack.c.l.b16 %v862
    %v902 = vunpack.c.h.b16 %v862
    %v903 = vunpack.c.l.b16 %v863
    %v904 = vunpack.c.h.b16 %v863
    %v905 = vunpack.c.l.b16 %v864
    %v906 = vunpack.c.h.b16 %v864
    %v907 = vunpack.c.l.b16 %v865
    %v908 = vunpack.c.h.b16 %v865
    %v909 = vunpack.c.l.b16 %v866
    %v910 = vunpack.c.h.b16 %v866
    %v911 = vunpack.c.l.b16 %v867
    %v912 = vunpack.c.h.b16 %v867
    %v913 = vunpack.c.l.b16 %v868
    %v914 = vunpack.c.h.b16 %v868
    %v915 = vunpack.c.l.b16 %v869
    %v916 = vunpack.c.h.b16 %v869
    %v917 = vunpack.c.l.b16 %v870
    %v918 = vunpack.c.h.b16 %v870
    %v919 = vunpack.c.l.b16 %v871
    %v920 = vunpack.c.h.b16 %v871
    %v921 = vunpack.c.l.b16 %v872
    %v922 = vunpack.c.h.b16 %v872
    %v923 = vunpack.c.l.b16 %v873
    %v924 = vunpack.c.h.b16 %v873
    %v925 = vunpack.c.l.b16 %v874
    %v926 = vunpack.c.h.b16 %v874
    %v927 = vunpack.c.l.b16 %v875
    %v928 = vunpack.c.h.b16 %v875
    %v929 = vunpack.c.l.b16 %v876
    %v930 = vunpack.c.h.b16 %v876
    %v931 = vunpack.c.l.b16 %v877
    %v932 = vunpack.c.h.b16 %v877
    %v933 = vunpack.c.l.b16 %v878
    %v934 = vunpack.c.h.b16 %v878
    %v935 = vunpack.c.l.b16 %v879
    %v936 = vunpack.c.h.b16 %v879
    %v937 = vpack.c.b16 %v899, %v899
    %v938 = vpack.c.b16 %v900, %v900
    %v939 = vpack.c.b16 %v901, %v901
    %v940 = vpack.c.b16 %v902, %v902
    %v941 = vpack.c.b16 %v903, %v903
    %v942 = vpack.c.b16 %v904, %v904
    %v943 = vpack.c.b16 %v905, %v905
    %v944 = vpack.c.b16 %v906, %v906
    %v945 = vpack.c.b16 %v907, %v907
    %v946 = vpack.c.b16 %v908, %v908
    %v947 = vpack.c.b16 %v909, %v909
    %v948 = vpack.c.b16 %v910, %v910
    %v949 = vpack.c.b16 %v911, %v911
    %v950 = vpack.c.b16 %v912, %v912
    %v951 = vpack.c.b16 %v913, %v913
    %v952 = vpack.c.b16 %v914, %v914
    %v953 = vpack.c.b16 %v915, %v915
    %v954 = vpack.c.b16 %v916, %v916
    %v955 = vpack.c.b16 %v917, %v917
    %v956 = vpack.c.b16 %v918, %v918
    %v957 = vpack.c.b16 %v919, %v919
    %v958 = vpack.c.b16 %v920, %v920
    %v959 = vpack.c.b16 %v921, %v921
    %v960 = vpack.c.b16 %v922, %v922
    %v961 = vpack.c.b16 %v923, %v923
    %v962 = vpack.c.b16 %v924, %v924
    %v963 = vpack.c.b16 %v925, %v925
    %v964 = vpack.c.b16 %v926, %v926
    %v965 = vpack.c.b16 %v927, %v927
    %v966 = vpack.c.b16 %v928, %v928
    %v967 = vpack.c.b16 %v929, %v929
    %v968 = vpack.c.b16 %v930, %v930
    %v969 = vpack.c.b16 %v931, %v931
    %v970 = vpack.c.b16 %v932, %v932
    %v971 = vpack.c.b16 %v933, %v933
    %v972 = vpack.c.b16 %v934, %v934
    %v973 = vpack.c.b16 %v935, %v935
    %v974 = vpack.c.b16 %v936, %v936
    %1013 = vst [vmem:[#allocation8] sm:$0xf] %v937
    %1014 = vst [vmem:[#allocation8 + $0x4] sm:$0xf] %v938
    %1015 = vst [vmem:[#allocation8 + $0x8] sm:$0xf] %v939
    %1016 = vst [vmem:[#allocation8 + $0xc] sm:$0xf] %v940
    %1017 = vst [vmem:[#allocation8 + $0x10] sm:$0xf] %v941
    %1018 = vst [vmem:[#allocation8 + $0x14] sm:$0xf] %v942
    %1019 = vst [vmem:[#allocation8 + $0x18] sm:$0xf] %v943
    %1020 = vst [vmem:[#allocation8 + $0x1c] sm:$0xf] %v944
    %1021 = vst [vmem:[#allocation8 + $0x20] sm:$0xf] %v945
    %1022 = vst [vmem:[#allocation8 + $0x24] sm:$0xf] %v946
    %1023 = vst [vmem:[#allocation8 + $0x28] sm:$0xf] %v947
    %1024 = vst [vmem:[#allocation8 + $0x2c] sm:$0xf] %v948
    %1025 = vst [vmem:[#allocation8 + $0x30] sm:$0xf] %v949
    %1026 = vst [vmem:[#allocation8 + $0x34] sm:$0xf] %v950
    %1027 = vst [vmem:[#allocation8 + $0x38] sm:$0xf] %v951
    %1028 = vst [vmem:[#allocation8 + $0x3c] sm:$0xf] %v952
    %1029 = vst [vmem:[#allocation8 + $0x40] sm:$0xf] %v953
    %1030 = vst [vmem:[#allocation8 + $0x44] sm:$0xf] %v954
    %1031 = vst [vmem:[#allocation8 + $0x48] sm:$0xf] %v955
    %1032 = vst [vmem:[#allocation8 + $0x4c] sm:$0xf] %v956
    %1033 = vst [vmem:[#allocation8 + $0x50] sm:$0xf] %v957
    %1034 = vst [vmem:[#allocation8 + $0x54] sm:$0xf] %v958
    %1035 = vst [vmem:[#allocation8 + $0x58] sm:$0xf] %v959
    %1036 = vst [vmem:[#allocation8 + $0x5c] sm:$0xf] %v960
    %1037 = vst [vmem:[#allocation8 + $0x60] sm:$0xf] %v961
    %1038 = vst [vmem:[#allocation8 + $0x64] sm:$0xf] %v962
    %1039 = vst [vmem:[#allocation8 + $0x68] sm:$0xf] %v963
    %1040 = vst [vmem:[#allocation8 + $0x6c] sm:$0xf] %v964
    %1041 = vst [vmem:[#allocation8 + $0x70] sm:$0xf] %v965
    %1042 = vst [vmem:[#allocation8 + $0x74] sm:$0xf] %v966
    %1043 = vst [vmem:[#allocation8 + $0x78] sm:$0xf] %v967
    %1044 = vst [vmem:[#allocation8 + $0x7c] sm:$0xf] %v968
    %1045 = vst [vmem:[#allocation8 + $0x80] sm:$0xf] %v969
    %1046 = vst [vmem:[#allocation8 + $0x84] sm:$0xf] %v970
    %1047 = vst [vmem:[#allocation8 + $0x88] sm:$0xf] %v971
    %1048 = vst [vmem:[#allocation8 + $0x8c] sm:$0xf] %v972
    %1049 = vst [vmem:[#allocation8 + $0x90] sm:$0xf] %v973
    %1050 = vst [vmem:[#allocation8 + $0x94] sm:$0xf] %v974
    %v1051 = vld [vmem:[#allocation2] sm:$0x7]
    %v1052 = vlaneseq
    %v1053 = vshrl.u32 %v1052, 7
    %v1054 = vsub.s32 0, %v1053
    %v1055 = vrot.slane %v1051, %v1054
    %v1056 = vlaneseq
    %v1057 = vshrl.u32 %v1056, 7
    %v1058 = vsub.s32 1, %v1057
    %v1059 = vrot.slane %v1051, %v1058
    %v1060 = vlaneseq
    %v1061 = vshrl.u32 %v1060, 7
    %v1062 = vsub.s32 2, %v1061
    %v1063 = vrot.slane %v1051, %v1062
    %vm1064 = vcmp.eq.s32.totalorder %v594, %v1055
    %vm1065 = vcmp.eq.s32.totalorder %v594, %v1059
    %vm1066 = vcmp.eq.s32.totalorder %v594, %v1063
    %vm1067 = vcmp.eq.s32.totalorder %v595, %v1055
    %vm1068 = vcmp.eq.s32.totalorder %v595, %v1059
    %vm1069 = vcmp.eq.s32.totalorder %v595, %v1063
    %vm1070 = vcmp.eq.s32.totalorder %v596, %v1055
    %vm1071 = vcmp.eq.s32.totalorder %v596, %v1059
    %vm1072 = vcmp.eq.s32.totalorder %v596, %v1063
    %v1073 = vsel %vm1064, 1.0, 0.0
    %v1074 = vsel %vm1065, 1.0, 0.0
    %v1075 = vsel %vm1066, 1.0, 0.0
    %v1076 = vsel %vm1067, 1.0, 0.0
    %v1077 = vsel %vm1068, 1.0, 0.0
    %v1078 = vsel %vm1069, 1.0, 0.0
    %v1079 = vsel %vm1070, 1.0, 0.0
    %v1080 = vsel %vm1071, 1.0, 0.0
    %v1081 = vsel %vm1072, 1.0, 0.0
    %v1082 = vpack.c.bf16 %v1076, %v1073
    %v1083 = vpack.c.bf16 %v1077, %v1074
    %v1084 = vpack.c.bf16 %v1078, %v1075
    %v1085 = vpack.c.bf16 %v1079, %v1079
    %v1086 = vpack.c.bf16 %v1080, %v1080
    %v1087 = vpack.c.bf16 %v1081, %v1081
    %v1088 = vld [vmem:[%s90] sm:$0x7]
    %v1089 = vlaneseq
    %v1090 = vshrl.u32 %v1089, 7
    %v1091 = vsub.s32 0, %v1090
    %v1092 = vrot.slane %v1088, %v1091
    %v1093 = vlaneseq
    %v1094 = vshrl.u32 %v1093, 7
    %v1095 = vsub.s32 1, %v1094
    %v1096 = vrot.slane %v1088, %v1095
    %v1097 = vlaneseq
    %v1098 = vshrl.u32 %v1097, 7
    %v1099 = vsub.s32 2, %v1098
    %v1100 = vrot.slane %v1088, %v1099
    %vm1101 = vcmp.eq.s32.totalorder %v594, %v1092
    %vm1102 = vcmp.eq.s32.totalorder %v594, %v1096
    %vm1103 = vcmp.eq.s32.totalorder %v594, %v1100
    %vm1104 = vcmp.eq.s32.totalorder %v595, %v1092
    %vm1105 = vcmp.eq.s32.totalorder %v595, %v1096
    %vm1106 = vcmp.eq.s32.totalorder %v595, %v1100
    %vm1107 = vcmp.eq.s32.totalorder %v596, %v1092
    %vm1108 = vcmp.eq.s32.totalorder %v596, %v1096
    %vm1109 = vcmp.eq.s32.totalorder %v596, %v1100
    %v1110 = vsel %vm1101, 1.0, 0.0
    %v1111 = vsel %vm1102, 1.0, 0.0
    %v1112 = vsel %vm1103, 1.0, 0.0
    %v1113 = vsel %vm1104, 1.0, 0.0
    %v1114 = vsel %vm1105, 1.0, 0.0
    %v1115 = vsel %vm1106, 1.0, 0.0
    %v1116 = vsel %vm1107, 1.0, 0.0
    %v1117 = vsel %vm1108, 1.0, 0.0
    %v1118 = vsel %vm1109, 1.0, 0.0
    %v1119 = vpack.c.bf16 %v1113, %v1110
    %v1120 = vpack.c.bf16 %v1114, %v1111
    %v1121 = vpack.c.bf16 %v1115, %v1112
    %v1122 = vpack.c.bf16 %v1116, %v1116
    %v1123 = vpack.c.bf16 %v1117, %v1117
    %v1124 = vpack.c.bf16 %v1118, %v1118
    %v1125 = vpack.c.bf16 %v407, %v403
    %v1126 = vpack.c.bf16 %v417, %v413
    %v1127 = vpack.c.bf16 %v427, %v423
    %v1128 = vpack.c.bf16 %v437, %v433
    %v1129 = vpack.c.bf16 %v447, %v443
    %v1130 = vpack.c.bf16 %v457, %v453
    %v1131 = vpack.c.bf16 %v467, %v463
    %v1132 = vpack.c.bf16 %v477, %v473
    %v1133 = vpack.c.bf16 %v487, %v483
    %v1134 = vpack.c.bf16 %v497, %v493
    %v1135 = vpack.c.bf16 %v507, %v503
    %v1136 = vpack.c.bf16 %v517, %v513
    %v1137 = vpack.c.bf16 %v527, %v523
    %v1138 = vpack.c.bf16 %v537, %v533
    %v1139 = vpack.c.bf16 %v547, %v543
    %v1140 = vpack.c.bf16 %v557, %v553
    %v1141 = vpack.c.bf16 %v567, %v563
    %v1142 = vpack.c.bf16 %v577, %v573
    %v1143 = vpack.c.bf16 %v587, %v583
    %v1144 = vld [vmem:[#allocation9] sm:$0xff]
    %v1145 = vld [vmem:[#allocation9 + $0x8] sm:$0xff]
    %v1146 = vld [vmem:[#allocation9 + $0x10] sm:$0xff]
    %vm1147 = vcmask 392192
    %v1149 = vsel %vm1147, %v1084, 0
    %v1152 = vsel %vm1147, %v1087, 0
    %1154 = vmatprep.subr.bf16.mxu0 0
    %1155 = vmatpush1.bf16.msra.mxu0 %v1125
    %1156 = vmatprep.subr.bf16.mxu0 0
    %1157 = vmatpush1.bf16.msra.mxu0 %v1126
    %1158 = vmatprep.subr.bf16.mxu0 0
    %1159 = vmatpush1.bf16.msra.mxu0 %v1127
    %1160 = vmatprep.subr.bf16.mxu0 0
    %1161 = vmatpush1.bf16.msra.mxu0 %v1128
    %1162 = vmatprep.subr.bf16.mxu0 0
    %1163 = vmatpush1.bf16.msra.mxu0 %v1129
    %1164 = vmatprep.subr.bf16.mxu0 0
    %1165 = vmatpush1.bf16.msra.mxu0 %v1130
    %1166 = vmatprep.subr.bf16.mxu0 0
    %1167 = vmatpush1.bf16.msra.mxu0 %v1131
    %1168 = vmatprep.subr.bf16.mxu0 0
    %1169 = vmatpush1.bf16.msra.mxu0 %v1132
    %1170 = vmatprep.subr.bf16.mxu0 0
    %1171 = vmatpush1.bf16.msra.mxu0 %v1133
    %1172 = vmatprep.subr.bf16.mxu0 0
    %1173 = vmatpush1.bf16.msra.mxu0 %v1134
    %1174 = vmatprep.subr.bf16.mxu0 0
    %1175 = vmatpush1.bf16.msra.mxu0 %v1135
    %1176 = vmatprep.subr.bf16.mxu0 0
    %1177 = vmatpush1.bf16.msra.mxu0 %v1136
    %1178 = vmatprep.subr.bf16.mxu0 0
    %1179 = vmatpush1.bf16.msra.mxu0 %v1137
    %1180 = vmatprep.subr.bf16.mxu0 0
    %1181 = vmatpush1.bf16.msra.mxu0 %v1138
    %1182 = vmatprep.subr.bf16.mxu0 0
    %1183 = vmatpush1.bf16.msra.mxu0 %v1139
    %1184 = vmatprep.subr.bf16.mxu0 0
    %1185 = vmatpush1.bf16.msra.mxu0 %v1140
    %1186 = vmatprep.mubr.bf16.mxu0 %v1083
    %1187 = vmatmul.mubr.bf16.gmra.mrb[0].mxu0 %v1082
    %v1188 = vpop.f32.mrb[0].mxu0
    %v1189 = vadd.f32 0.0, %v1188
    %v1190 = vpop.f32.mrb[0].mxu0
    %v1191 = vpop.f32.mrb[0].mxu0
    %v1192 = vadd.f32 0.0, %v1191
    %v1193 = vpop.f32.mrb[0].mxu0
    %1194 = vmatprep.mubr.bf16.mxu0 %v1086
    %1195 = vmatmul.mubr.bf16.gmra.mrb[0].mxu0 %v1085
    %v1196 = vpop.f32.mrb[0].mxu0
    %v1197 = vadd.f32 0.0, %v1196
    %v1198 = vpop.f32.mrb[0].mxu0
    %v1199 = vpop.f32.mrb[0].mxu0
    %v1200 = vpop.f32.mrb[0].mxu0
    %1201 = vdwg.mxu0
    %1202 = vmatprep.subr.bf16.mxu0 0
    %1203 = vmatpush1.bf16.msra.mxu0 %v1141
    %1204 = vmatprep.subr.bf16.mxu0 0
    %1205 = vmatpush1.bf16.msra.mxu0 %v1142
    %1206 = vmatprep.subr.bf16.mxu0 0
    %1207 = vmatpush1.bf16.msra.mxu0 %v1143
    %1208 = vmatprep.subr.bf16.mxu0 0
    %1209 = vmatpush1.bf16.msra.mxu0 0
    %1210 = vmatprep.subr.bf16.mxu0 0
    %1211 = vmatpush1.bf16.msra.mxu0 0
    %1212 = vmatprep.subr.bf16.mxu0 0
    %1213 = vmatpush1.bf16.msra.mxu0 0
    %1214 = vmatprep.subr.bf16.mxu0 0
    %1215 = vmatpush1.bf16.msra.mxu0 0
    %1216 = vmatprep.subr.bf16.mxu0 0
    %1217 = vmatpush1.bf16.msra.mxu0 0
    %1218 = vmatprep.subr.bf16.mxu0 0
    %1219 = vmatpush1.bf16.msra.mxu0 0
    %1220 = vmatprep.subr.bf16.mxu0 0
    %1221 = vmatpush1.bf16.msra.mxu0 0
    %1222 = vmatprep.subr.bf16.mxu0 0
    %1223 = vmatpush1.bf16.msra.mxu0 0
    %1224 = vmatprep.subr.bf16.mxu0 0
    %1225 = vmatpush1.bf16.msra.mxu0 0
    %1226 = vmatprep.subr.bf16.mxu0 0
    %1227 = vmatpush1.bf16.msra.mxu0 0
    %1228 = vmatprep.subr.bf16.mxu0 0
    %1229 = vmatpush1.bf16.msra.mxu0 0
    %1230 = vmatprep.subr.bf16.mxu0 0
    %1231 = vmatpush1.bf16.msra.mxu0 0
    %1232 = vmatprep.subr.bf16.mxu0 0
    %1233 = vmatpush1.bf16.msra.mxu0 0
    %1234 = vmatprep.mubr.bf16.mxu0 0
    %1235 = vmatmul.mubr.bf16.gmra.mrb[0].mxu0 %v1149
    %v1236 = vpop.f32.mrb[0].mxu0
    %v1237 = vadd.f32 %v1189, %v1236
    %v1238 = vpop.f32.mrb[0].mxu0
    %v1239 = vpop.f32.mrb[0].mxu0
    %v1240 = vadd.f32 %v1192, %v1239
    %v1241 = vpop.f32.mrb[0].mxu0
    %1242 = vmatprep.mubr.bf16.mxu0 0
    %1243 = vmatmul.mubr.bf16.gmra.mrb[0].mxu0 %v1152
    %v1244 = vpop.f32.mrb[0].mxu0
    %v1245 = vadd.f32 %v1197, %v1244
    %v1246 = vpop.f32.mrb[0].mxu0
    %v1247 = vpop.f32.mrb[0].mxu0
    %v1248 = vpop.f32.mrb[0].mxu0
    %1249 = vdwg.mxu0
    %v1250 = vadd.f32 %v1144, %v1237
    %v1251 = vadd.f32 %v1145, %v1240
    %v1252 = vadd.f32 %v1146, %v1245
    %1253 = vst [vmem:[#allocation9] sm:$0xff] %v1250
    %1254 = vst [vmem:[#allocation9 + $0x8] sm:$0xff] %v1251
    %1255 = vst [vmem:[#allocation9 + $0x10] sm:$0xff] %v1252
    %v1256 = vld [vmem:[#allocation11] sm:$0xff]
    %v1257 = vld [vmem:[#allocation11 + $0x8] sm:$0xff]
    %v1258 = vld [vmem:[#allocation11 + $0x10] sm:$0xff]
    %v1260 = vsel %vm1147, %v1121, 0
    %v1263 = vsel %vm1147, %v1124, 0
    %1265 = vmatprep.subr.bf16.mxu0 0
    %1266 = vmatpush1.bf16.msra.mxu0 %v1125
    %1267 = vmatprep.subr.bf16.mxu0 0
    %1268 = vmatpush1.bf16.msra.mxu0 %v1126
    %1269 = vmatprep.subr.bf16.mxu0 0
    %1270 = vmatpush1.bf16.msra.mxu0 %v1127
    %1271 = vmatprep.subr.bf16.mxu0 0
    %1272 = vmatpush1.bf16.msra.mxu0 %v1128
    %1273 = vmatprep.subr.bf16.mxu0 0
    %1274 = vmatpush1.bf16.msra.mxu0 %v1129
    %1275 = vmatprep.subr.bf16.mxu0 0
    %1276 = vmatpush1.bf16.msra.mxu0 %v1130
    %1277 = vmatprep.subr.bf16.mxu0 0
    %1278 = vmatpush1.bf16.msra.mxu0 %v1131
    %1279 = vmatprep.subr.bf16.mxu0 0
    %1280 = vmatpush1.bf16.msra.mxu0 %v1132
    %1281 = vmatprep.subr.bf16.mxu0 0
    %1282 = vmatpush1.bf16.msra.mxu0 %v1133
    %1283 = vmatprep.subr.bf16.mxu0 0
    %1284 = vmatpush1.bf16.msra.mxu0 %v1134
    %1285 = vmatprep.subr.bf16.mxu0 0
    %1286 = vmatpush1.bf16.msra.mxu0 %v1135
    %1287 = vmatprep.subr.bf16.mxu0 0
    %1288 = vmatpush1.bf16.msra.mxu0 %v1136
    %1289 = vmatprep.subr.bf16.mxu0 0
    %1290 = vmatpush1.bf16.msra.mxu0 %v1137
    %1291 = vmatprep.subr.bf16.mxu0 0
    %1292 = vmatpush1.bf16.msra.mxu0 %v1138
    %1293 = vmatprep.subr.bf16.mxu0 0
    %1294 = vmatpush1.bf16.msra.mxu0 %v1139
    %1295 = vmatprep.subr.bf16.mxu0 0
    %1296 = vmatpush1.bf16.msra.mxu0 %v1140
    %1297 = vmatprep.mubr.bf16.mxu0 %v1120
    %1298 = vmatmul.mubr.bf16.gmra.mrb[0].mxu0 %v1119
    %v1299 = vpop.f32.mrb[0].mxu0
    %v1300 = vadd.f32 0.0, %v1299
    %v1301 = vpop.f32.mrb[0].mxu0
    %v1302 = vpop.f32.mrb[0].mxu0
    %v1303 = vadd.f32 0.0, %v1302
    %v1304 = vpop.f32.mrb[0].mxu0
    %1305 = vmatprep.mubr.bf16.mxu0 %v1123
    %1306 = vmatmul.mubr.bf16.gmra.mrb[0].mxu0 %v1122
    %v1307 = vpop.f32.mrb[0].mxu0
    %v1308 = vadd.f32 0.0, %v1307
    %v1309 = vpop.f32.mrb[0].mxu0
    %v1310 = vpop.f32.mrb[0].mxu0
    %v1311 = vpop.f32.mrb[0].mxu0
    %1312 = vdwg.mxu0
    %1313 = vmatprep.subr.bf16.mxu0 0
    %1314 = vmatpush1.bf16.msra.mxu0 %v1141
    %1315 = vmatprep.subr.bf16.mxu0 0
    %1316 = vmatpush1.bf16.msra.mxu0 %v1142
    %1317 = vmatprep.subr.bf16.mxu0 0
    %1318 = vmatpush1.bf16.msra.mxu0 %v1143
    %1319 = vmatprep.subr.bf16.mxu0 0
    %1320 = vmatpush1.bf16.msra.mxu0 0
    %1321 = vmatprep.subr.bf16.mxu0 0
    %1322 = vmatpush1.bf16.msra.mxu0 0
    %1323 = vmatprep.subr.bf16.mxu0 0
    %1324 = vmatpush1.bf16.msra.mxu0 0
    %1325 = vmatprep.subr.bf16.mxu0 0
    %1326 = vmatpush1.bf16.msra.mxu0 0
    %1327 = vmatprep.subr.bf16.mxu0 0
    %1328 = vmatpush1.bf16.msra.mxu0 0
    %1329 = vmatprep.subr.bf16.mxu0 0
    %1330 = vmatpush1.bf16.msra.mxu0 0
    %1331 = vmatprep.subr.bf16.mxu0 0
    %1332 = vmatpush1.bf16.msra.mxu0 0
    %1333 = vmatprep.subr.bf16.mxu0 0
    %1334 = vmatpush1.bf16.msra.mxu0 0
    %1335 = vmatprep.subr.bf16.mxu0 0
    %1336 = vmatpush1.bf16.msra.mxu0 0
    %1337 = vmatprep.subr.bf16.mxu0 0
    %1338 = vmatpush1.bf16.msra.mxu0 0
    %1339 = vmatprep.subr.bf16.mxu0 0
    %1340 = vmatpush1.bf16.msra.mxu0 0
    %1341 = vmatprep.subr.bf16.mxu0 0
    %1342 = vmatpush1.bf16.msra.mxu0 0
    %1343 = vmatprep.subr.bf16.mxu0 0
    %1344 = vmatpush1.bf16.msra.mxu0 0
    %1345 = vmatprep.mubr.bf16.mxu0 0
    %1346 = vmatmul.mubr.bf16.gmra.mrb[0].mxu0 %v1260
    %v1347 = vpop.f32.mrb[0].mxu0
    %v1348 = vadd.f32 %v1300, %v1347
    %v1349 = vpop.f32.mrb[0].mxu0
    %v1350 = vpop.f32.mrb[0].mxu0
    %v1351 = vadd.f32 %v1303, %v1350
    %v1352 = vpop.f32.mrb[0].mxu0
    %1353 = vmatprep.mubr.bf16.mxu0 0
    %1354 = vmatmul.mubr.bf16.gmra.mrb[0].mxu0 %v1263
    %v1355 = vpop.f32.mrb[0].mxu0
    %v1356 = vadd.f32 %v1308, %v1355
    %v1357 = vpop.f32.mrb[0].mxu0
    %v1358 = vpop.f32.mrb[0].mxu0
    %v1359 = vpop.f32.mrb[0].mxu0
    %1360 = vdwg.mxu0
    %v1361 = vadd.f32 %v1256, %v1348
    %v1362 = vadd.f32 %v1257, %v1351
    %v1363 = vadd.f32 %v1258, %v1356
    %1364 = vst [vmem:[#allocation11] sm:$0xff] %v1361
    %1365 = vst [vmem:[#allocation11 + $0x8] sm:$0xff] %v1362
    %1366 = vst [vmem:[#allocation11 + $0x10] sm:$0xff] %v1363
    // Predicated region
    $region38: #{tpu_custom_call.1} parent=1 // pred_check
      _
    $region39: #{tpu_custom_call.1} parent=1 // pred_check_branch
      %1368 = sbr.rel (0) target = $region41
    $region40: #{tpu_custom_call.1} parent=1 // pred_region
      %s1369 = sadd.s32 0, 0
      %s1370 = smul.u32 38, %s1369
      %s1372 = ssub.s32 2432, 2432
      %1373 = vsyncadd [#allocation4], %s1372
      %s1374 = smul.addr %s1370, 64
      %s1375 = scalar_lea.hbm %s5, %s1374
      %s1376 = sshll.u32 [#allocation8], 4
      %s1377 = int_to_ptr.vmem [resolvable:$true] %s1376
      %1382 = dma.vmem_to_hbm [thread:$0]  %s1377, 2432, %s1375, [#allocation4], 64, 64, 4
    $region41: #{tpu_custom_call.1} parent=1 // pred_fallthru
      _
    // Predicated region
    $region42: #{tpu_custom_call.1} parent=1 // pred_check
      _
    $region43: #{tpu_custom_call.1} parent=1 // pred_check_branch
      %1384 = sbr.rel (0) target = $region45
    $region44: #{tpu_custom_call.1} parent=1 // pred_region
      %s1386 = ssub.s32 384, 384
      %1387 = vsyncadd [#allocation10], %s1386
      %s1388 = sshll.u32 [#allocation9], 4
      %s1389 = int_to_ptr.vmem [resolvable:$true] %s1388
      %1394 = dma.vmem_to_hbm [thread:$0]  %s1389, 384, %s6, [#allocation10], 128, 128, 8
    $region45: #{tpu_custom_call.1} parent=1 // pred_fallthru
      _
    // Predicated region
    $region46: #{tpu_custom_call.1} parent=1 // pred_check
      _
    $region47: #{tpu_custom_call.1} parent=1 // pred_check_branch
      %1396 = sbr.rel (0) target = $region49
    $region48: #{tpu_custom_call.1} parent=1 // pred_region
      %s1398 = ssub.s32 384, 384
      %1399 = vsyncadd [#allocation10], %s1398
      %s1400 = sshll.u32 [#allocation11], 4
      %s1401 = int_to_ptr.vmem [resolvable:$true] %s1400
      %1406 = dma.vmem_to_hbm [thread:$0]  %s1401, 384, %s7, [#allocation10], 128, 128, 8
    $region49: #{tpu_custom_call.1} parent=1 // pred_fallthru
      _
    // Predicated region
    $region50: #{tpu_custom_call.1} parent=1 // pred_check
      _
    $region51: #{tpu_custom_call.1} parent=1 // pred_check_branch
      %1408 = sbr.rel (0) target = $region53
    $region52: #{tpu_custom_call.1} parent=1 // pred_region
      %1409 = dma.done [#allocation4], 2432
    $region53: #{tpu_custom_call.1} parent=1 // pred_fallthru
      _
    // Predicated region
    $region54: #{tpu_custom_call.1} parent=1 // pred_check
      _
    $region55: #{tpu_custom_call.1} parent=1 // pred_check_branch
      %1411 = sbr.rel (0) target = $region57
    $region56: #{tpu_custom_call.1} parent=1 // pred_region
      %1412 = dma.done [#allocation10], 384
    $region57: #{tpu_custom_call.1} parent=1 // pred_fallthru
      _
    // Predicated region
    $region58: #{tpu_custom_call.1} parent=1 // pred_check
      _
    $region59: #{tpu_custom_call.1} parent=1 // pred_check_branch
      %1414 = sbr.rel (0) target = $region61
    $region60: #{tpu_custom_call.1} parent=1 // pred_region
      %1415 = dma.done [#allocation10], 384
    $region61: #{tpu_custom_call.1} parent=1 // pred_fallthru
      _
    %1416 = vsyncpa [#allocation3], 1
    %1417 = vsyncpa [#allocation6], 1
    %1418 = vsyncpa [#allocation4], 1
    %1419 = vsyncpa [#allocation10], 1

</llo_original>
